<compile_context>
chip_gen: v7x
topology: tpu7x:2x2x1
jax: 0.10.0
libtpu: 0.0.40
codegen_flags: <defaults>
</compile_context>

<pallas_src>
import math

import jax
import jax.numpy as jnp
from jax.experimental import pallas as pl
from jax.experimental.pallas import tpu as pltpu

# ----------------------------- config (small, BERT-like) ----------------------------
B = 2          # batch
S = 8          # sequence length
H = 32         # hidden size
NH = 4         # num attention heads
DH = H // NH   # attention head size
EPS = 1e-12    # LayerNorm eps

MM_DTYPE = jnp.bfloat16   # MXU operand dtype (f32 accumulation); set to jnp.float32 for exact parity

# Lane-dense output packing: fold _PACK consecutive row-groups into the lane dim so the
# final store is an unmasked 128-lane vst (H=32 alone would be a masked 32-lane store).
_LANE = 128
_PACK = _LANE // H if (_LANE % H == 0 and (B * S) % (_LANE // H) == 0 and _LANE // H > 1) else 1
_OUT_ROWS = (B * S) // _PACK
_OUT_SHAPE = (_OUT_ROWS, _PACK * H)


def _selfatt_kernel(x_ref, mask_ref,
                    wqkv_ref, bqkv_ref, wo_ref, bo_ref, gamma_ref, beta_ref,
                    o_ref):
    """Whole BertSelfattLayer forward (all batches, all heads) in one invocation.

    x_ref     : (B*S, H)        f32  activations (batch folded into rows)
    mask_ref  : (B*NH, 1, S)    f32  additive attention mask, repeated per head
    wqkv_ref  : (H, 3H)         bf16 fused [Wq*scale | Wk | Wv]  (in, out)
    bqkv_ref  : (1, 3H)         f32  fused [bq*scale | bk | bv]
    wo_ref    : (H, H)          bf16 output dense weight (in, out)
    bo_ref    : (1, H)          f32  output dense bias
    gamma/beta: (1, H)          f32  LayerNorm affine
    o_ref     : (_OUT_ROWS, _PACK*H)  f32 lane-dense output slab
    """
    x = x_ref[...]                                                     # (B*S, H) f32

    # ---- fused Q/K/V projection: ONE MXU matmul (scale already folded into Wq/bq) ----
    qkv = jnp.dot(x.astype(MM_DTYPE), wqkv_ref[...],
                  preferred_element_type=jnp.float32) + bqkv_ref[...]  # (B*S, 3H) f32

    # ---- split heads into a (B*NH, S, DH) batch (static lane slices + major stack) ----
    def to_heads(col0):
        parts = [qkv[:, col0 + h * DH: col0 + (h + 1) * DH].reshape(B, S, DH)
                 for h in range(NH)]
        return jnp.stack(parts, axis=1).reshape(B * NH, S, DH).astype(MM_DTYPE)

    q = to_heads(0)
    k = to_heads(H)
    v = to_heads(2 * H)

    # ---- batched attention: one einsum for scores, one for context (batch = B*NH) -----
    scores = jnp.einsum("bqd,bkd->bqk", q, k,
                        preferred_element_type=jnp.float32)            # (B*NH, S, S)
    scores = scores + mask_ref[...]                                    # single hoisted broadcast

    # numerically-stable softmax over keys (exact reciprocal, f32)
    m = jnp.max(scores, axis=-1, keepdims=True)
    e = jnp.exp(scores - m)
    p = e / jnp.sum(e, axis=-1, keepdims=True)
    # attention dropout: eval mode -> identity

    ctx = jnp.einsum("bqk,bkd->bqd", p.astype(MM_DTYPE), v,
                     preferred_element_type=jnp.float32)               # (B*NH, S, DH)

    # ---- merge heads back to (B*S, H) and ONE K=H output projection -------------------
    ctx4 = ctx.reshape(B, NH, S, DH)
    ctx2d = jnp.concatenate([ctx4[:, h] for h in range(NH)], axis=-1).reshape(B * S, H)
    out = jnp.dot(ctx2d.astype(MM_DTYPE), wo_ref[...],
                  preferred_element_type=jnp.float32) + bo_ref[...]    # (B*S, H) f32

    # ---- (dropout = id) + residual + LayerNorm (biased variance, like torch) ----------
    y = out + x
    mean = jnp.mean(y, axis=-1, keepdims=True)
    var = jnp.mean((y - mean) ** 2, axis=-1, keepdims=True)
    y = (y - mean) * jax.lax.rsqrt(var + EPS)
    y = y * gamma_ref[...] + beta_ref[...]

    # ---- lane-dense store: pack _PACK row-groups into the lane dim -> unmasked vst ----
    if _PACK > 1:
        y = jnp.concatenate(
            [y[g * _OUT_ROWS:(g + 1) * _OUT_ROWS, :] for g in range(_PACK)], axis=-1)
    o_ref[...] = y.astype(o_ref.dtype)


def prepare_params(params):
    """One-time parameter prep (kept OUT of the per-call jitted forward): transpose to
    (in, out), fold 1/sqrt(DH) into Wq/bq, fuse Q/K/V, cast matmul weights to MM_DTYPE."""
    scale = 1.0 / math.sqrt(DH)
    wqkv = jnp.concatenate(
        [params["wq"].T * scale, params["wk"].T, params["wv"].T], axis=1)       # (H, 3H)
    bqkv = jnp.concatenate(
        [params["bq"] * scale, params["bk"], params["bv"]]).reshape(1, 3 * H)   # (1, 3H)
    return {
        "wqkv": wqkv.astype(MM_DTYPE),
        "bqkv": bqkv.astype(jnp.float32),
        "wo": params["wo"].T.astype(MM_DTYPE),                                  # (H, H)
        "bo": params["bo"].reshape(1, H).astype(jnp.float32),
        "gamma": params["gamma"].reshape(1, H).astype(jnp.float32),
        "beta": params["beta"].reshape(1, H).astype(jnp.float32),
    }


@jax.jit
def bert_selfatt_layer(x, attention_mask, prepped):
    """x: (B, S, H) f32; attention_mask: (B, 1, 1, S) additive BERT mask;
    prepped: output of prepare_params()."""
    x2 = x.reshape(B * S, H).astype(jnp.float32)
    # Repeat the per-batch additive mask over heads once -> (B*NH, 1, S).
    mask_bh = jnp.broadcast_to(
        attention_mask.reshape(B, 1, 1, S), (B, NH, 1, S)).reshape(B * NH, 1, S)

    flops = (2 * (B * S) * H * 3 * H           # fused QKV projection
             + 2 * (B * NH) * S * S * DH * 2   # scores + context
             + 2 * (B * S) * H * H)            # output projection
    transcendentals = (B * NH) * S * S + (B * S)              # exp + rsqrt
    bytes_accessed = (x2.size * 4 + mask_bh.size * 4
                      + prepped["wqkv"].size * prepped["wqkv"].dtype.itemsize
                      + prepped["wo"].size * prepped["wo"].dtype.itemsize
                      + (prepped["bqkv"].size + prepped["bo"].size
                         + prepped["gamma"].size + prepped["beta"].size) * 4
                      + B * S * H * 4)

    vmem = pl.BlockSpec(memory_space=pltpu.MemorySpace.VMEM)  # whole arrays resident in VMEM
    out = pl.pallas_call(
        _selfatt_kernel,
        out_shape=jax.ShapeDtypeStruct(_OUT_SHAPE, jnp.float32),
        in_specs=[vmem] * 8,
        out_specs=vmem,
        cost_estimate=pl.CostEstimate(flops=flops,
                                      transcendentals=transcendentals,
                                      bytes_accessed=bytes_accessed),
    )(x2, mask_bh, prepped["wqkv"], prepped["bqkv"], prepped["wo"],
      prepped["bo"], prepped["gamma"], prepped["beta"])

    # Undo the lane-dense packing: (_OUT_ROWS, _PACK*H) -> (B*S, H).
    if _PACK > 1:
        out = out.reshape(_OUT_ROWS, _PACK, H).transpose(1, 0, 2).reshape(B * S, H)
    return out.reshape(B, S, H)


def _reference(x, attention_mask, params):
    """Plain-JAX f32 reference of the torch forward (eval mode)."""
    def linear(t, w, b):
        return t @ w.T + b

    q = linear(x, params["wq"], params["bq"])
    k = linear(x, params["wk"], params["bk"])
    v = linear(x, params["wv"], params["bv"])

    def split(t):  # (B,S,H) -> (B,NH,S,DH)
        return t.reshape(B, S, NH, DH).transpose(0, 2, 1, 3)

    qh, kh, vh = split(q), split(k), split(v)
    scores = jnp.einsum("bhqd,bhkd->bhqk", qh, kh) / math.sqrt(DH)
    scores = scores + attention_mask            # (B,1,1,S) broadcasts
    probs = jax.nn.softmax(scores, axis=-1)
    ctx = jnp.einsum("bhqk,bhkd->bhqd", probs, vh)
    ctx = ctx.transpose(0, 2, 1, 3).reshape(B, S, H)

    out = linear(ctx, params["wo"], params["bo"])
    y = out + x
    mean = jnp.mean(y, axis=-1, keepdims=True)
    var = jnp.mean((y - mean) ** 2, axis=-1, keepdims=True)
    return (y - mean) / jnp.sqrt(var + EPS) * params["gamma"] + params["beta"]


def _init_params(key):
    ks = jax.random.split(key, 8)
    std = 0.02
    return {
        "wq": std * jax.random.normal(ks[0], (H, H), jnp.float32),
        "bq": std * jax.random.normal(ks[1], (H,), jnp.float32),
        "wk": std * jax.random.normal(ks[2], (H, H), jnp.float32),
        "bk": std * jax.random.normal(ks[3], (H,), jnp.float32),
        "wv": std * jax.random.normal(ks[4], (H, H), jnp.float32),
        "bv": std * jax.random.normal(ks[5], (H,), jnp.float32),
        "wo": std * jax.random.normal(ks[6], (H, H), jnp.float32),
        "bo": std * jax.random.normal(ks[7], (H,), jnp.float32),
        "gamma": jnp.ones((H,), jnp.float32),
        "beta": jnp.zeros((H,), jnp.float32),
    }


if __name__ == "__main__":
    key = jax.random.PRNGKey(0)
    k_x, k_p = jax.random.split(key)

    x = jax.random.normal(k_x, (B, S, H), jnp.float32)
    # Standard BERT additive mask: first batch attends to all 8 tokens, second to first 6.
    lengths = jnp.array([8, 6])
    valid = (jnp.arange(S)[None, :] < lengths[:, None]).astype(jnp.float32)  # (B, S)
    attention_mask = ((1.0 - valid) * -10000.0).reshape(B, 1, 1, S)

    params = _init_params(k_p)
    prepped = prepare_params(params)     # one-time weight prep, outside the jitted forward

    out = bert_selfatt_layer(x, attention_mask, prepped)
    jax.block_until_ready(out)

    ref = _reference(x, attention_mask, params)
    assert out.shape == (B, S, H)
    # bf16 MXU operands (f32 accumulation) -> slightly looser tolerance vs. the f32 reference.
    assert jnp.allclose(out, ref, rtol=1e-2, atol=1e-2), "mismatch vs. reference"

    print("KERNEL_OK")
</pallas_src>

<mosaic_0001>
module attributes {stable_mosaic.version = 11 : i64} {
  func.func @_selfatt_kernel(%arg0: memref<16x32xf32, #tpu.memory_space<vmem>>, %arg1: memref<8x1x8xf32, #tpu.memory_space<vmem>>, %arg2: memref<32x96xbf16, #tpu.memory_space<vmem>>, %arg3: memref<1x96xf32, #tpu.memory_space<vmem>>, %arg4: memref<32x32xbf16, #tpu.memory_space<vmem>>, %arg5: memref<1x32xf32, #tpu.memory_space<vmem>>, %arg6: memref<1x32xf32, #tpu.memory_space<vmem>>, %arg7: memref<1x32xf32, #tpu.memory_space<vmem>>, %arg8: memref<4x128xf32, #tpu.memory_space<vmem>>) attributes {dimension_semantics = [], scalar_prefetch = 0 : i64, scratch_operands = 0 : i64, tpu.core_type = #tpu.core_type<tc>} {
    %c0 = arith.constant 0 : index
    %c0_0 = arith.constant 0 : index
    %0 = vector.load %arg0[%c0, %c0_0] : memref<16x32xf32, #tpu.memory_space<vmem>>, vector<16x32xf32>
    %1 = arith.truncf %0 : vector<16x32xf32> to vector<16x32xbf16>
    %c0_1 = arith.constant 0 : index
    %c0_2 = arith.constant 0 : index
    %2 = vector.load %arg2[%c0_1, %c0_2] : memref<32x96xbf16, #tpu.memory_space<vmem>>, vector<32x96xbf16>
    %cst = arith.constant dense<0.000000e+00> : vector<16x96xf32>
    %3 = tpu.matmul %1, %2, %cst {dimension_numbers = #tpu.dot_dimension_numbers<[1], [0], [0], [1], [0, 0, 1, 1], [], []>} : vector<16x32xbf16>, vector<32x96xbf16>, vector<16x96xf32> -> vector<16x96xf32>
    %c0_3 = arith.constant 0 : index
    %c0_4 = arith.constant 0 : index
    %4 = vector.load %arg3[%c0_3, %c0_4] : memref<1x96xf32, #tpu.memory_space<vmem>>, vector<1x96xf32>
    %5 = vector.broadcast %4 : vector<1x96xf32> to vector<16x96xf32>
    %6 = arith.addf %3, %5 : vector<16x96xf32>
    %7 = vector.extract_strided_slice %6 {offsets = [0, 0], sizes = [16, 8], strides = [1, 1]} : vector<16x96xf32> to vector<16x8xf32>
    %8 = vector.shape_cast %7 : vector<16x8xf32> to vector<2x8x8xf32>
    %9 = vector.extract_strided_slice %6 {offsets = [0, 8], sizes = [16, 8], strides = [1, 1]} : vector<16x96xf32> to vector<16x8xf32>
    %10 = vector.shape_cast %9 : vector<16x8xf32> to vector<2x8x8xf32>
    %11 = vector.extract_strided_slice %6 {offsets = [0, 16], sizes = [16, 8], strides = [1, 1]} : vector<16x96xf32> to vector<16x8xf32>
    %12 = vector.shape_cast %11 : vector<16x8xf32> to vector<2x8x8xf32>
    %13 = vector.extract_strided_slice %6 {offsets = [0, 24], sizes = [16, 8], strides = [1, 1]} : vector<16x96xf32> to vector<16x8xf32>
    %14 = vector.shape_cast %13 : vector<16x8xf32> to vector<2x8x8xf32>
    %15 = vector.shape_cast %8 : vector<2x8x8xf32> to vector<2x1x8x8xf32>
    %16 = vector.shape_cast %10 : vector<2x8x8xf32> to vector<2x1x8x8xf32>
    %17 = vector.shape_cast %12 : vector<2x8x8xf32> to vector<2x1x8x8xf32>
    %18 = vector.shape_cast %14 : vector<2x8x8xf32> to vector<2x1x8x8xf32>
    %19 = tpu.concatenate %15, %16, %17, %18 in 1 : vector<2x1x8x8xf32>, vector<2x1x8x8xf32>, vector<2x1x8x8xf32>, vector<2x1x8x8xf32> -> vector<2x4x8x8xf32>
    %20 = vector.shape_cast %19 : vector<2x4x8x8xf32> to vector<8x8x8xf32>
    %21 = arith.truncf %20 : vector<8x8x8xf32> to vector<8x8x8xbf16>
    %22 = vector.extract_strided_slice %6 {offsets = [0, 32], sizes = [16, 8], strides = [1, 1]} : vector<16x96xf32> to vector<16x8xf32>
    %23 = vector.shape_cast %22 : vector<16x8xf32> to vector<2x8x8xf32>
    %24 = vector.extract_strided_slice %6 {offsets = [0, 40], sizes = [16, 8], strides = [1, 1]} : vector<16x96xf32> to vector<16x8xf32>
    %25 = vector.shape_cast %24 : vector<16x8xf32> to vector<2x8x8xf32>
    %26 = vector.extract_strided_slice %6 {offsets = [0, 48], sizes = [16, 8], strides = [1, 1]} : vector<16x96xf32> to vector<16x8xf32>
    %27 = vector.shape_cast %26 : vector<16x8xf32> to vector<2x8x8xf32>
    %28 = vector.extract_strided_slice %6 {offsets = [0, 56], sizes = [16, 8], strides = [1, 1]} : vector<16x96xf32> to vector<16x8xf32>
    %29 = vector.shape_cast %28 : vector<16x8xf32> to vector<2x8x8xf32>
    %30 = vector.shape_cast %23 : vector<2x8x8xf32> to vector<2x1x8x8xf32>
    %31 = vector.shape_cast %25 : vector<2x8x8xf32> to vector<2x1x8x8xf32>
    %32 = vector.shape_cast %27 : vector<2x8x8xf32> to vector<2x1x8x8xf32>
    %33 = vector.shape_cast %29 : vector<2x8x8xf32> to vector<2x1x8x8xf32>
    %34 = tpu.concatenate %30, %31, %32, %33 in 1 : vector<2x1x8x8xf32>, vector<2x1x8x8xf32>, vector<2x1x8x8xf32>, vector<2x1x8x8xf32> -> vector<2x4x8x8xf32>
    %35 = vector.shape_cast %34 : vector<2x4x8x8xf32> to vector<8x8x8xf32>
    %36 = arith.truncf %35 : vector<8x8x8xf32> to vector<8x8x8xbf16>
    %37 = vector.extract_strided_slice %6 {offsets = [0, 64], sizes = [16, 8], strides = [1, 1]} : vector<16x96xf32> to vector<16x8xf32>
    %38 = vector.shape_cast %37 : vector<16x8xf32> to vector<2x8x8xf32>
    %39 = vector.extract_strided_slice %6 {offsets = [0, 72], sizes = [16, 8], strides = [1, 1]} : vector<16x96xf32> to vector<16x8xf32>
    %40 = vector.shape_cast %39 : vector<16x8xf32> to vector<2x8x8xf32>
    %41 = vector.extract_strided_slice %6 {offsets = [0, 80], sizes = [16, 8], strides = [1, 1]} : vector<16x96xf32> to vector<16x8xf32>
    %42 = vector.shape_cast %41 : vector<16x8xf32> to vector<2x8x8xf32>
    %43 = vector.extract_strided_slice %6 {offsets = [0, 88], sizes = [16, 8], strides = [1, 1]} : vector<16x96xf32> to vector<16x8xf32>
    %44 = vector.shape_cast %43 : vector<16x8xf32> to vector<2x8x8xf32>
    %45 = vector.shape_cast %38 : vector<2x8x8xf32> to vector<2x1x8x8xf32>
    %46 = vector.shape_cast %40 : vector<2x8x8xf32> to vector<2x1x8x8xf32>
    %47 = vector.shape_cast %42 : vector<2x8x8xf32> to vector<2x1x8x8xf32>
    %48 = vector.shape_cast %44 : vector<2x8x8xf32> to vector<2x1x8x8xf32>
    %49 = tpu.concatenate %45, %46, %47, %48 in 1 : vector<2x1x8x8xf32>, vector<2x1x8x8xf32>, vector<2x1x8x8xf32>, vector<2x1x8x8xf32> -> vector<2x4x8x8xf32>
    %50 = vector.shape_cast %49 : vector<2x4x8x8xf32> to vector<8x8x8xf32>
    %51 = arith.truncf %50 : vector<8x8x8xf32> to vector<8x8x8xbf16>
    "tpu.trace_start"() <{level = 10 : i32, message = "bqd,bkd->bqk"}> : () -> ()
    %cst_5 = arith.constant dense<0.000000e+00> : vector<8x8x8xf32>
    %52 = tpu.matmul %21, %36, %cst_5 {dimension_numbers = #tpu.dot_dimension_numbers<[2], [2], [1], [1], [0, 0, 0, 1, 1, 1], [0], [0]>} : vector<8x8x8xbf16>, vector<8x8x8xbf16>, vector<8x8x8xf32> -> vector<8x8x8xf32>
    "tpu.trace_stop"() : () -> ()
    %c0_6 = arith.constant 0 : index
    %c0_7 = arith.constant 0 : index
    %c0_8 = arith.constant 0 : index
    %53 = vector.load %arg1[%c0_6, %c0_7, %c0_8] : memref<8x1x8xf32, #tpu.memory_space<vmem>>, vector<8x1x8xf32>
    %54 = vector.broadcast %53 : vector<8x1x8xf32> to vector<8x8x8xf32>
    %55 = arith.addf %52, %54 : vector<8x8x8xf32>
    %cst_9 = arith.constant dense<0xFF800000> : vector<8x8xf32>
    %56 = vector.multi_reduction <maximumf>, %55, %cst_9 [2] : vector<8x8x8xf32> to vector<8x8xf32>
    %57 = vector.shape_cast %56 : vector<8x8xf32> to vector<8x8x1xf32>
    %58 = vector.broadcast %57 : vector<8x8x1xf32> to vector<8x8x8xf32>
    %59 = arith.subf %55, %58 : vector<8x8x8xf32>
    %60 = math.exp %59 : vector<8x8x8xf32>
    %cst_10 = arith.constant dense<0.000000e+00> : vector<8x8xf32>
    %61 = vector.multi_reduction <add>, %60, %cst_10 [2] : vector<8x8x8xf32> to vector<8x8xf32>
    %62 = vector.shape_cast %61 : vector<8x8xf32> to vector<8x8x1xf32>
    %63 = vector.broadcast %62 : vector<8x8x1xf32> to vector<8x8x8xf32>
    %64 = arith.divf %60, %63 : vector<8x8x8xf32>
    %65 = arith.truncf %64 : vector<8x8x8xf32> to vector<8x8x8xbf16>
    "tpu.trace_start"() <{level = 10 : i32, message = "bqk,bkd->bqd"}> : () -> ()
    %cst_11 = arith.constant dense<0.000000e+00> : vector<8x8x8xf32>
    %66 = tpu.matmul %65, %51, %cst_11 {dimension_numbers = #tpu.dot_dimension_numbers<[2], [1], [1], [2], [0, 0, 0, 1, 1, 2], [0], [0]>} : vector<8x8x8xbf16>, vector<8x8x8xbf16>, vector<8x8x8xf32> -> vector<8x8x8xf32>
    "tpu.trace_stop"() : () -> ()
    %67 = vector.shape_cast %66 : vector<8x8x8xf32> to vector<2x4x8x8xf32>
    %68 = vector.extract_strided_slice %67 {offsets = [0, 0, 0, 0], sizes = [2, 1, 8, 8], strides = [1, 1, 1, 1]} : vector<2x4x8x8xf32> to vector<2x1x8x8xf32>
    %69 = vector.shape_cast %68 : vector<2x1x8x8xf32> to vector<2x8x8xf32>
    %70 = vector.extract_strided_slice %67 {offsets = [0, 1, 0, 0], sizes = [2, 1, 8, 8], strides = [1, 1, 1, 1]} : vector<2x4x8x8xf32> to vector<2x1x8x8xf32>
    %71 = vector.shape_cast %70 : vector<2x1x8x8xf32> to vector<2x8x8xf32>
    %72 = vector.extract_strided_slice %67 {offsets = [0, 2, 0, 0], sizes = [2, 1, 8, 8], strides = [1, 1, 1, 1]} : vector<2x4x8x8xf32> to vector<2x1x8x8xf32>
    %73 = vector.shape_cast %72 : vector<2x1x8x8xf32> to vector<2x8x8xf32>
    %74 = vector.extract_strided_slice %67 {offsets = [0, 3, 0, 0], sizes = [2, 1, 8, 8], strides = [1, 1, 1, 1]} : vector<2x4x8x8xf32> to vector<2x1x8x8xf32>
    %75 = vector.shape_cast %74 : vector<2x1x8x8xf32> to vector<2x8x8xf32>
    %76 = tpu.concatenate %69, %71, %73, %75 in 2 : vector<2x8x8xf32>, vector<2x8x8xf32>, vector<2x8x8xf32>, vector<2x8x8xf32> -> vector<2x8x32xf32>
    %77 = vector.shape_cast %76 : vector<2x8x32xf32> to vector<16x32xf32>
    %78 = arith.truncf %77 : vector<16x32xf32> to vector<16x32xbf16>
    %c0_12 = arith.constant 0 : index
    %c0_13 = arith.constant 0 : index
    %79 = vector.load %arg4[%c0_12, %c0_13] : memref<32x32xbf16, #tpu.memory_space<vmem>>, vector<32x32xbf16>
    %cst_14 = arith.constant dense<0.000000e+00> : vector<16x32xf32>
    %80 = tpu.matmul %78, %79, %cst_14 {dimension_numbers = #tpu.dot_dimension_numbers<[1], [0], [0], [1], [0, 0, 1, 1], [], []>} : vector<16x32xbf16>, vector<32x32xbf16>, vector<16x32xf32> -> vector<16x32xf32>
    %c0_15 = arith.constant 0 : index
    %c0_16 = arith.constant 0 : index
    %81 = vector.load %arg5[%c0_15, %c0_16] : memref<1x32xf32, #tpu.memory_space<vmem>>, vector<1x32xf32>
    %82 = vector.broadcast %81 : vector<1x32xf32> to vector<16x32xf32>
    %83 = arith.addf %80, %82 : vector<16x32xf32>
    %84 = arith.addf %83, %0 : vector<16x32xf32>
    %cst_17 = arith.constant dense<0.000000e+00> : vector<16xf32>
    %85 = vector.multi_reduction <add>, %84, %cst_17 [1] : vector<16x32xf32> to vector<16xf32>
    %86 = vector.shape_cast %85 : vector<16xf32> to vector<16x1xf32>
    %cst_18 = arith.constant 3.200000e+01 : f32
    %87 = vector.broadcast %cst_18 : f32 to vector<16x1xf32>
    %88 = arith.divf %86, %87 : vector<16x1xf32>
    %89 = vector.broadcast %88 : vector<16x1xf32> to vector<16x32xf32>
    %90 = arith.subf %84, %89 : vector<16x32xf32>
    %91 = arith.mulf %90, %90 : vector<16x32xf32>
    %cst_19 = arith.constant dense<0.000000e+00> : vector<16xf32>
    %92 = vector.multi_reduction <add>, %91, %cst_19 [1] : vector<16x32xf32> to vector<16xf32>
    %93 = vector.shape_cast %92 : vector<16xf32> to vector<16x1xf32>
    %cst_20 = arith.constant 3.200000e+01 : f32
    %94 = vector.broadcast %cst_20 : f32 to vector<16x1xf32>
    %95 = arith.divf %93, %94 : vector<16x1xf32>
    %96 = vector.broadcast %88 : vector<16x1xf32> to vector<16x32xf32>
    %97 = arith.subf %84, %96 : vector<16x32xf32>
    %cst_21 = arith.constant 9.99999996E-13 : f32
    %98 = vector.broadcast %cst_21 : f32 to vector<16x1xf32>
    %99 = arith.addf %95, %98 : vector<16x1xf32>
    %100 = math.rsqrt %99 : vector<16x1xf32>
    %101 = vector.broadcast %100 : vector<16x1xf32> to vector<16x32xf32>
    %102 = arith.mulf %97, %101 : vector<16x32xf32>
    %c0_22 = arith.constant 0 : index
    %c0_23 = arith.constant 0 : index
    %103 = vector.load %arg6[%c0_22, %c0_23] : memref<1x32xf32, #tpu.memory_space<vmem>>, vector<1x32xf32>
    %104 = vector.broadcast %103 : vector<1x32xf32> to vector<16x32xf32>
    %105 = arith.mulf %102, %104 : vector<16x32xf32>
    %c0_24 = arith.constant 0 : index
    %c0_25 = arith.constant 0 : index
    %106 = vector.load %arg7[%c0_24, %c0_25] : memref<1x32xf32, #tpu.memory_space<vmem>>, vector<1x32xf32>
    %107 = vector.broadcast %106 : vector<1x32xf32> to vector<16x32xf32>
    %108 = arith.addf %105, %107 : vector<16x32xf32>
    %109 = vector.extract_strided_slice %108 {offsets = [0, 0], sizes = [4, 32], strides = [1, 1]} : vector<16x32xf32> to vector<4x32xf32>
    %110 = vector.extract_strided_slice %108 {offsets = [4, 0], sizes = [4, 32], strides = [1, 1]} : vector<16x32xf32> to vector<4x32xf32>
    %111 = vector.extract_strided_slice %108 {offsets = [8, 0], sizes = [4, 32], strides = [1, 1]} : vector<16x32xf32> to vector<4x32xf32>
    %112 = vector.extract_strided_slice %108 {offsets = [12, 0], sizes = [4, 32], strides = [1, 1]} : vector<16x32xf32> to vector<4x32xf32>
    %113 = tpu.concatenate %109, %110, %111, %112 in 1 : vector<4x32xf32>, vector<4x32xf32>, vector<4x32xf32>, vector<4x32xf32> -> vector<4x128xf32>
    %c0_26 = arith.constant 0 : index
    %c0_27 = arith.constant 0 : index
    %114 = vector.load %arg8[%c0_26, %c0_27] : memref<4x128xf32, #tpu.memory_space<vmem>>, vector<4x128xf32>
    tpu.vector_store %arg8[%c0_26, %c0_27], %113 {strides = array<i32>} : memref<4x128xf32, #tpu.memory_space<vmem>>, vector<4x128xf32>,
    return
  }
}

</mosaic_0001>

<llo_original>
// kernel: bert_selfatt_layer.1
$region0: #{bert_selfatt_layer.1}
  #allocation0 [shape = 'u32[]', space=smem, size = 0x4, offset = 0x4, fixed_abs, tag = 'smem constant byte address 0x4 - core index']
  #allocation1 [shape = 'u32[144,128]{1,0:T(1,128)}', space=vmem, size = 0x12000, scoped, tag = 'internal scratch']
  %s0 = inlined_call_operand.vmem [shape: f32[16,32], index: 0, kind: input, shape index: {}]
  %s1 = inlined_call_operand.vmem [shape: f32[8,1,8], index: 1, kind: input, shape index: {}]
  %s2 = inlined_call_operand.vmem [shape: bf16[32,96], index: 2, kind: input, shape index: {}]
  %s3 = inlined_call_operand.vmem [shape: f32[1,96], index: 3, kind: input, shape index: {}]
  %s4 = inlined_call_operand.hbm [shape: bf16[32,32], index: 4, kind: input, shape index: {}]
  %s5 = inlined_call_operand.hbm [shape: f32[1,32], index: 5, kind: input, shape index: {}]
  %s6 = inlined_call_operand.vmem [shape: f32[1,32], index: 6, kind: input, shape index: {}]
  %s7 = inlined_call_operand.hbm [shape: f32[1,32], index: 7, kind: input, shape index: {}]
  %s8 = inlined_call_operand.vmem [shape: f32[4,128], index: 8, kind: output, shape index: {}]
  %s9 = sld [smem:[#allocation0]]
  $region54: #{bert_selfatt_layer.1} parent=0
    _
  %s11 = ssub.s32 1, %s9
  %s12 = scalar_select 0, %s11, %s9
  $region1: #{bert_selfatt_layer.1} parent=0
    #allocation2 [shape = 'u8[8192]{0}', space=vmem, size = 0x2000, scoped, tag = 'input window, operand 4, single buffered']
    #allocation3 [shape = 's32[1]{0}', space=sflag, size = 0x4, scoped, tag = 'scoped memory for bert_selfatt_layer.1']
    #allocation4 [shape = 'u8[512]{0}', space=vmem, size = 0x400, scoped, tag = 'input window, operand 5, single buffered']
    #allocation5 [shape = 's32[1]{0}', space=sflag, size = 0x4, scoped, tag = 'scoped memory for bert_selfatt_layer.1']
    #allocation6 [shape = 'u8[512]{0}', space=vmem, size = 0x400, scoped, tag = 'input window, operand 7, single buffered']
    %13 = vsyncpa [#allocation3], 0
    %14 = vsyncpa [#allocation5], 0
    // Predicated region
    $region2: #{bert_selfatt_layer.1} parent=1 // pred_check
      _
    $region3: #{bert_selfatt_layer.1} parent=1 // pred_check_branch
      %16 = sbr.rel (0) target = $region5
    $region4: #{bert_selfatt_layer.1} parent=1 // pred_region
      _
    $region5: #{bert_selfatt_layer.1} parent=1 // pred_fallthru
      _
    // Predicated region
    $region6: #{bert_selfatt_layer.1} parent=1 // pred_check
      _
    $region7: #{bert_selfatt_layer.1} parent=1 // pred_check_branch
      %18 = sbr.rel (0) target = $region9
    $region8: #{bert_selfatt_layer.1} parent=1 // pred_region
      _
    $region9: #{bert_selfatt_layer.1} parent=1 // pred_fallthru
      _
    // Predicated region
    $region10: #{bert_selfatt_layer.1} parent=1 // pred_check
      _
    $region11: #{bert_selfatt_layer.1} parent=1 // pred_check_branch
      %20 = sbr.rel (0) target = $region13
    $region12: #{bert_selfatt_layer.1} parent=1 // pred_region
      _
    $region13: #{bert_selfatt_layer.1} parent=1 // pred_fallthru
      _
    // Predicated region
    $region14: #{bert_selfatt_layer.1} parent=1 // pred_check
      _
    $region15: #{bert_selfatt_layer.1} parent=1 // pred_check_branch
      %22 = sbr.rel (0) target = $region17
    $region16: #{bert_selfatt_layer.1} parent=1 // pred_region
      _
    $region17: #{bert_selfatt_layer.1} parent=1 // pred_fallthru
      _
    // Predicated region
    $region18: #{bert_selfatt_layer.1} parent=1 // pred_check
      _
    $region19: #{bert_selfatt_layer.1} parent=1 // pred_check_branch
      %24 = sbr.rel (0) target = $region21
    $region20: #{bert_selfatt_layer.1} parent=1 // pred_region
      %s26 = ssub.s32 256, 256
      %27 = vsyncadd [#allocation3], %s26
      %s28 = sshll.u32 [#allocation2], 4
      %s29 = int_to_ptr.vmem [resolvable:$true] %s28
      %34 = dma.hbm_to_vmem [thread:$0]  %s4, 256, %s29, [#allocation3], 64, 64, 4
    $region21: #{bert_selfatt_layer.1} parent=1 // pred_fallthru
      _
    // Predicated region
    $region22: #{bert_selfatt_layer.1} parent=1 // pred_check
      _
    $region23: #{bert_selfatt_layer.1} parent=1 // pred_check_branch
      %36 = sbr.rel (0) target = $region25
    $region24: #{bert_selfatt_layer.1} parent=1 // pred_region
      %s38 = ssub.s32 16, 16
      %39 = vsyncadd [#allocation5], %s38
      %s41 = sshll.u32 [#allocation4], 4
      %s42 = int_to_ptr.vmem [resolvable:$true] %s41
      %44 = dma.hbm_to_vmem [thread:$0]  %s5, 16, %s42, [#allocation5]
    $region25: #{bert_selfatt_layer.1} parent=1 // pred_fallthru
      _
    // Predicated region
    $region26: #{bert_selfatt_layer.1} parent=1 // pred_check
      _
    $region27: #{bert_selfatt_layer.1} parent=1 // pred_check_branch
      %46 = sbr.rel (0) target = $region29
    $region28: #{bert_selfatt_layer.1} parent=1 // pred_region
      _
    $region29: #{bert_selfatt_layer.1} parent=1 // pred_fallthru
      _
    // Predicated region
    $region30: #{bert_selfatt_layer.1} parent=1 // pred_check
      _
    $region31: #{bert_selfatt_layer.1} parent=1 // pred_check_branch
      %48 = sbr.rel (0) target = $region33
    $region32: #{bert_selfatt_layer.1} parent=1 // pred_region
      %s50 = ssub.s32 16, 16
      %51 = vsyncadd [#allocation5], %s50
      %s53 = sshll.u32 [#allocation6], 4
      %s54 = int_to_ptr.vmem [resolvable:$true] %s53
      %56 = dma.hbm_to_vmem [thread:$0]  %s7, 16, %s54, [#allocation5]
    $region33: #{bert_selfatt_layer.1} parent=1 // pred_fallthru
      _
    // Predicated region
    $region34: #{bert_selfatt_layer.1} parent=1 // pred_check
      _
    $region35: #{bert_selfatt_layer.1} parent=1 // pred_check_branch
      %58 = sbr.rel (0) target = $region37
    $region36: #{bert_selfatt_layer.1} parent=1 // pred_region
      %59 = dma.done [#allocation3], 256
    $region37: #{bert_selfatt_layer.1} parent=1 // pred_fallthru
      _
    // Predicated region
    $region38: #{bert_selfatt_layer.1} parent=1 // pred_check
      _
    $region39: #{bert_selfatt_layer.1} parent=1 // pred_check_branch
      %61 = sbr.rel (0) target = $region41
    $region40: #{bert_selfatt_layer.1} parent=1 // pred_region
      %62 = dma.done [#allocation5], 16
    $region41: #{bert_selfatt_layer.1} parent=1 // pred_fallthru
      _
    // Predicated region
    $region42: #{bert_selfatt_layer.1} parent=1 // pred_check
      _
    $region43: #{bert_selfatt_layer.1} parent=1 // pred_check_branch
      %64 = sbr.rel (0) target = $region45
    $region44: #{bert_selfatt_layer.1} parent=1 // pred_region
      %65 = dma.done [#allocation5], 16
    $region45: #{bert_selfatt_layer.1} parent=1 // pred_fallthru
      _
    %v67 = vld [vmem:[%s0] sm:$0xff]
    %v68 = vld [vmem:[%s0 + $0x8] sm:$0xff]
    %v69 = vpack.c.bf16 %v68, %v67
    %v70 = vld [vmem:[%s2] sm:$0xf]
    %v71 = vld [vmem:[%s2 + $0x4] sm:$0xf]
    %v72 = vld [vmem:[%s2 + $0x8] sm:$0xf]
    %v73 = vld [vmem:[%s2 + $0xc] sm:$0xf]
    %v74 = vld [vmem:[%s3] sm:$0x1]
    %v76 = vlaneseq
    %v77 = vshrl.u32 %v76, 7
    %v78 = vsub.s32 0, %v77
    %v79 = vrot.slane %v74, %v78
    %v85 = vunpack.c.l.b16 %v70
    %v86 = vunpack.c.l.b16 %v71
    %v87 = vunpack.c.l.b16 %v72
    %v88 = vunpack.c.l.b16 %v73
    %v89 = vpack.c.b16 %v86, %v85
    %v90 = vpack.c.b16 %v88, %v87
    %vm93 = vcmask 261120
    %v95 = vsel %vm93, %v69, 0
    %97 = vmatprep.subr.bf16.mxu0 0
    %98 = vmatpush1.bf16.msra.mxu0 %v89
    %99 = vmatprep.subr.bf16.mxu0 0
    %100 = vmatpush1.bf16.msra.mxu0 %v90
    %101 = vmatprep.subr.bf16.mxu0 0
    %102 = vmatpush1.bf16.msra.mxu0 0
    %103 = vmatprep.subr.bf16.mxu0 0
    %104 = vmatpush1.bf16.msra.mxu0 0
    %105 = vmatprep.subr.bf16.mxu0 0
    %106 = vmatpush1.bf16.msra.mxu0 0
    %107 = vmatprep.subr.bf16.mxu0 0
    %108 = vmatpush1.bf16.msra.mxu0 0
    %109 = vmatprep.subr.bf16.mxu0 0
    %110 = vmatpush1.bf16.msra.mxu0 0
    %111 = vmatprep.subr.bf16.mxu0 0
    %112 = vmatpush1.bf16.msra.mxu0 0
    %113 = vmatprep.subr.bf16.mxu0 0
    %114 = vmatpush1.bf16.msra.mxu0 0
    %115 = vmatprep.subr.bf16.mxu0 0
    %116 = vmatpush1.bf16.msra.mxu0 0
    %117 = vmatprep.subr.bf16.mxu0 0
    %118 = vmatpush1.bf16.msra.mxu0 0
    %119 = vmatprep.subr.bf16.mxu0 0
    %120 = vmatpush1.bf16.msra.mxu0 0
    %121 = vmatprep.subr.bf16.mxu0 0
    %122 = vmatpush1.bf16.msra.mxu0 0
    %123 = vmatprep.subr.bf16.mxu0 0
    %124 = vmatpush1.bf16.msra.mxu0 0
    %125 = vmatprep.subr.bf16.mxu0 0
    %126 = vmatpush1.bf16.msra.mxu0 0
    %127 = vmatprep.subr.bf16.mxu0 0
    %128 = vmatpush1.bf16.msra.mxu0 0
    %129 = vmatprep.mubr.bf16.mxu0 0
    %130 = vmatmul.mubr.bf16.gmra.mrb[0].mxu0 %v95
    %v131 = vpop.f32.mrb[0].mxu0
    %v132 = vadd.f32 %v79, %v131
    %v133 = vpop.f32.mrb[0].mxu0
    %v134 = vpop.f32.mrb[0].mxu0
    %v135 = vadd.f32 %v79, %v134
    %v136 = vpop.f32.mrb[0].mxu0
    %137 = vdwg.mxu0
    %140 = vrot.lane.b32.xlu0 %v132, 120
    %v141 = vpop.permute.xlu0 %140
    %142 = vrot.lane.b32.xlu0 %v135, 120
    %v143 = vpop.permute.xlu0 %142
    %146 = vrot.lane.b32.xlu0 %v132, 112
    %v147 = vpop.permute.xlu0 %146
    %148 = vrot.lane.b32.xlu0 %v135, 112
    %v149 = vpop.permute.xlu0 %148
    %152 = vrot.lane.b32.xlu0 %v132, 104
    %v153 = vpop.permute.xlu0 %152
    %154 = vrot.lane.b32.xlu0 %v135, 104
    %v155 = vpop.permute.xlu0 %154
    %v158 = vpack.c.bf16 %v132, %v132
    %v159 = vpack.c.bf16 %v141, %v141
    %v160 = vpack.c.bf16 %v147, %v147
    %v161 = vpack.c.bf16 %v153, %v153
    %v162 = vpack.c.bf16 %v135, %v135
    %v163 = vpack.c.bf16 %v143, %v143
    %v164 = vpack.c.bf16 %v149, %v149
    %v165 = vpack.c.bf16 %v155, %v155
    %v166 = vld [vmem:[%s1] sm:$0x1]
    %v167 = vld [vmem:[%s1 + $0x1] sm:$0x1]
    %v168 = vld [vmem:[%s1 + $0x2] sm:$0x1]
    %v169 = vld [vmem:[%s1 + $0x3] sm:$0x1]
    %v170 = vld [vmem:[%s1 + $0x4] sm:$0x1]
    %v171 = vld [vmem:[%s1 + $0x5] sm:$0x1]
    %v172 = vld [vmem:[%s1 + $0x6] sm:$0x1]
    %v173 = vld [vmem:[%s1 + $0x7] sm:$0x1]
    %v182 = vlaneseq
    %v183 = vshrl.u32 %v182, 7
    %v184 = vsub.s32 0, %v183
    %v185 = vrot.slane %v166, %v184
    %v186 = vlaneseq
    %v187 = vshrl.u32 %v186, 7
    %v188 = vsub.s32 0, %v187
    %v189 = vrot.slane %v167, %v188
    %v190 = vlaneseq
    %v191 = vshrl.u32 %v190, 7
    %v192 = vsub.s32 0, %v191
    %v193 = vrot.slane %v168, %v192
    %v194 = vlaneseq
    %v195 = vshrl.u32 %v194, 7
    %v196 = vsub.s32 0, %v195
    %v197 = vrot.slane %v169, %v196
    %v198 = vlaneseq
    %v199 = vshrl.u32 %v198, 7
    %v200 = vsub.s32 0, %v199
    %v201 = vrot.slane %v170, %v200
    %v202 = vlaneseq
    %v203 = vshrl.u32 %v202, 7
    %v204 = vsub.s32 0, %v203
    %v205 = vrot.slane %v171, %v204
    %v206 = vlaneseq
    %v207 = vshrl.u32 %v206, 7
    %v208 = vsub.s32 0, %v207
    %v209 = vrot.slane %v172, %v208
    %v210 = vlaneseq
    %v211 = vshrl.u32 %v210, 7
    %v212 = vsub.s32 0, %v211
    %v213 = vrot.slane %v173, %v212
    %223 = vrot.lane.b32.xlu0 %v158, 96
    %v224 = vpop.permute.xlu0 %223
    %vm225 = vcmask 64512
    %v227 = vsel %vm225, %v158, 0
    %v230 = vsel %vm225, %v224, 0
    %232 = vmatprep.subr.bf16.mxu0 0
    %233 = vmatpush1.bf16.xpose.msra.mxu0 %v230
    %234 = vmatprep.subr.bf16.mxu0 0
    %235 = vmatpush1.bf16.xpose.msra.mxu0 0
    %236 = vmatprep.subr.bf16.mxu0 0
    %237 = vmatpush1.bf16.xpose.msra.mxu0 0
    %238 = vmatprep.subr.bf16.mxu0 0
    %239 = vmatpush1.bf16.xpose.msra.mxu0 0
    %240 = vmatprep.subr.bf16.mxu0 0
    %241 = vmatpush1.bf16.xpose.msra.mxu0 0
    %242 = vmatprep.subr.bf16.mxu0 0
    %243 = vmatpush1.bf16.xpose.msra.mxu0 0
    %244 = vmatprep.subr.bf16.mxu0 0
    %245 = vmatpush1.bf16.xpose.msra.mxu0 0
    %246 = vmatprep.subr.bf16.mxu0 0
    %247 = vmatpush1.bf16.xpose.msra.mxu0 0
    %248 = vmatprep.subr.bf16.mxu0 0
    %249 = vmatpush1.bf16.xpose.msra.mxu0 0
    %250 = vmatprep.subr.bf16.mxu0 0
    %251 = vmatpush1.bf16.xpose.msra.mxu0 0
    %252 = vmatprep.subr.bf16.mxu0 0
    %253 = vmatpush1.bf16.xpose.msra.mxu0 0
    %254 = vmatprep.subr.bf16.mxu0 0
    %255 = vmatpush1.bf16.xpose.msra.mxu0 0
    %256 = vmatprep.subr.bf16.mxu0 0
    %257 = vmatpush1.bf16.xpose.msra.mxu0 0
    %258 = vmatprep.subr.bf16.mxu0 0
    %259 = vmatpush1.bf16.xpose.msra.mxu0 0
    %260 = vmatprep.subr.bf16.mxu0 0
    %261 = vmatpush1.bf16.xpose.msra.mxu0 0
    %262 = vmatprep.subr.bf16.mxu0 0
    %263 = vmatpush1.bf16.xpose.msra.mxu0 0
    %264 = vmatprep.mubr.bf16.mxu0 0
    %265 = vmatmul.mubr.bf16.gmra.mrb[0].mxu0 %v227
    %v266 = vpop.f32.mrb[0].mxu0
    %v267 = vadd.f32 %v185, %v266
    %v268 = vpop.f32.mrb[0].mxu0
    %v269 = vpop.f32.mrb[0].mxu0
    %v270 = vpop.f32.mrb[0].mxu0
    %271 = vdwg.mxu0
    %273 = vrot.lane.b32.xlu0 %v159, 96
    %v274 = vpop.permute.xlu0 %273
    %v276 = vsel %vm225, %v159, 0
    %v279 = vsel %vm225, %v274, 0
    %281 = vmatprep.subr.bf16.mxu0 0
    %282 = vmatpush1.bf16.xpose.msra.mxu0 %v279
    %283 = vmatprep.subr.bf16.mxu0 0
    %284 = vmatpush1.bf16.xpose.msra.mxu0 0
    %285 = vmatprep.subr.bf16.mxu0 0
    %286 = vmatpush1.bf16.xpose.msra.mxu0 0
    %287 = vmatprep.subr.bf16.mxu0 0
    %288 = vmatpush1.bf16.xpose.msra.mxu0 0
    %289 = vmatprep.subr.bf16.mxu0 0
    %290 = vmatpush1.bf16.xpose.msra.mxu0 0
    %291 = vmatprep.subr.bf16.mxu0 0
    %292 = vmatpush1.bf16.xpose.msra.mxu0 0
    %293 = vmatprep.subr.bf16.mxu0 0
    %294 = vmatpush1.bf16.xpose.msra.mxu0 0
    %295 = vmatprep.subr.bf16.mxu0 0
    %296 = vmatpush1.bf16.xpose.msra.mxu0 0
    %297 = vmatprep.subr.bf16.mxu0 0
    %298 = vmatpush1.bf16.xpose.msra.mxu0 0
    %299 = vmatprep.subr.bf16.mxu0 0
    %300 = vmatpush1.bf16.xpose.msra.mxu0 0
    %301 = vmatprep.subr.bf16.mxu0 0
    %302 = vmatpush1.bf16.xpose.msra.mxu0 0
    %303 = vmatprep.subr.bf16.mxu0 0
    %304 = vmatpush1.bf16.xpose.msra.mxu0 0
    %305 = vmatprep.subr.bf16.mxu0 0
    %306 = vmatpush1.bf16.xpose.msra.mxu0 0
    %307 = vmatprep.subr.bf16.mxu0 0
    %308 = vmatpush1.bf16.xpose.msra.mxu0 0
    %309 = vmatprep.subr.bf16.mxu0 0
    %310 = vmatpush1.bf16.xpose.msra.mxu0 0
    %311 = vmatprep.subr.bf16.mxu0 0
    %312 = vmatpush1.bf16.xpose.msra.mxu0 0
    %313 = vmatprep.mubr.bf16.mxu0 0
    %314 = vmatmul.mubr.bf16.gmra.mrb[0].mxu0 %v276
    %v315 = vpop.f32.mrb[0].mxu0
    %v316 = vadd.f32 %v189, %v315
    %v317 = vpop.f32.mrb[0].mxu0
    %v318 = vpop.f32.mrb[0].mxu0
    %v319 = vpop.f32.mrb[0].mxu0
    %320 = vdwg.mxu0
    %322 = vrot.lane.b32.xlu0 %v160, 96
    %v323 = vpop.permute.xlu0 %322
    %v325 = vsel %vm225, %v160, 0
    %v328 = vsel %vm225, %v323, 0
    %330 = vmatprep.subr.bf16.mxu0 0
    %331 = vmatpush1.bf16.xpose.msra.mxu0 %v328
    %332 = vmatprep.subr.bf16.mxu0 0
    %333 = vmatpush1.bf16.xpose.msra.mxu0 0
    %334 = vmatprep.subr.bf16.mxu0 0
    %335 = vmatpush1.bf16.xpose.msra.mxu0 0
    %336 = vmatprep.subr.bf16.mxu0 0
    %337 = vmatpush1.bf16.xpose.msra.mxu0 0
    %338 = vmatprep.subr.bf16.mxu0 0
    %339 = vmatpush1.bf16.xpose.msra.mxu0 0
    %340 = vmatprep.subr.bf16.mxu0 0
    %341 = vmatpush1.bf16.xpose.msra.mxu0 0
    %342 = vmatprep.subr.bf16.mxu0 0
    %343 = vmatpush1.bf16.xpose.msra.mxu0 0
    %344 = vmatprep.subr.bf16.mxu0 0
    %345 = vmatpush1.bf16.xpose.msra.mxu0 0
    %346 = vmatprep.subr.bf16.mxu0 0
    %347 = vmatpush1.bf16.xpose.msra.mxu0 0
    %348 = vmatprep.subr.bf16.mxu0 0
    %349 = vmatpush1.bf16.xpose.msra.mxu0 0
    %350 = vmatprep.subr.bf16.mxu0 0
    %351 = vmatpush1.bf16.xpose.msra.mxu0 0
    %352 = vmatprep.subr.bf16.mxu0 0
    %353 = vmatpush1.bf16.xpose.msra.mxu0 0
    %354 = vmatprep.subr.bf16.mxu0 0
    %355 = vmatpush1.bf16.xpose.msra.mxu0 0
    %356 = vmatprep.subr.bf16.mxu0 0
    %357 = vmatpush1.bf16.xpose.msra.mxu0 0
    %358 = vmatprep.subr.bf16.mxu0 0
    %359 = vmatpush1.bf16.xpose.msra.mxu0 0
    %360 = vmatprep.subr.bf16.mxu0 0
    %361 = vmatpush1.bf16.xpose.msra.mxu0 0
    %362 = vmatprep.mubr.bf16.mxu0 0
    %363 = vmatmul.mubr.bf16.gmra.mrb[0].mxu0 %v325
    %v364 = vpop.f32.mrb[0].mxu0
    %v365 = vadd.f32 %v193, %v364
    %v366 = vpop.f32.mrb[0].mxu0
    %v367 = vpop.f32.mrb[0].mxu0
    %v368 = vpop.f32.mrb[0].mxu0
    %369 = vdwg.mxu0
    %371 = vrot.lane.b32.xlu0 %v161, 96
    %v372 = vpop.permute.xlu0 %371
    %v374 = vsel %vm225, %v161, 0
    %v377 = vsel %vm225, %v372, 0
    %379 = vmatprep.subr.bf16.mxu0 0
    %380 = vmatpush1.bf16.xpose.msra.mxu0 %v377
    %381 = vmatprep.subr.bf16.mxu0 0
    %382 = vmatpush1.bf16.xpose.msra.mxu0 0
    %383 = vmatprep.subr.bf16.mxu0 0
    %384 = vmatpush1.bf16.xpose.msra.mxu0 0
    %385 = vmatprep.subr.bf16.mxu0 0
    %386 = vmatpush1.bf16.xpose.msra.mxu0 0
    %387 = vmatprep.subr.bf16.mxu0 0
    %388 = vmatpush1.bf16.xpose.msra.mxu0 0
    %389 = vmatprep.subr.bf16.mxu0 0
    %390 = vmatpush1.bf16.xpose.msra.mxu0 0
    %391 = vmatprep.subr.bf16.mxu0 0
    %392 = vmatpush1.bf16.xpose.msra.mxu0 0
    %393 = vmatprep.subr.bf16.mxu0 0
    %394 = vmatpush1.bf16.xpose.msra.mxu0 0
    %395 = vmatprep.subr.bf16.mxu0 0
    %396 = vmatpush1.bf16.xpose.msra.mxu0 0
    %397 = vmatprep.subr.bf16.mxu0 0
    %398 = vmatpush1.bf16.xpose.msra.mxu0 0
    %399 = vmatprep.subr.bf16.mxu0 0
    %400 = vmatpush1.bf16.xpose.msra.mxu0 0
    %401 = vmatprep.subr.bf16.mxu0 0
    %402 = vmatpush1.bf16.xpose.msra.mxu0 0
    %403 = vmatprep.subr.bf16.mxu0 0
    %404 = vmatpush1.bf16.xpose.msra.mxu0 0
    %405 = vmatprep.subr.bf16.mxu0 0
    %406 = vmatpush1.bf16.xpose.msra.mxu0 0
    %407 = vmatprep.subr.bf16.mxu0 0
    %408 = vmatpush1.bf16.xpose.msra.mxu0 0
    %409 = vmatprep.subr.bf16.mxu0 0
    %410 = vmatpush1.bf16.xpose.msra.mxu0 0
    %411 = vmatprep.mubr.bf16.mxu0 0
    %412 = vmatmul.mubr.bf16.gmra.mrb[0].mxu0 %v374
    %v413 = vpop.f32.mrb[0].mxu0
    %v414 = vadd.f32 %v197, %v413
    %v415 = vpop.f32.mrb[0].mxu0
    %v416 = vpop.f32.mrb[0].mxu0
    %v417 = vpop.f32.mrb[0].mxu0
    %418 = vdwg.mxu0
    %420 = vrot.lane.b32.xlu0 %v162, 96
    %v421 = vpop.permute.xlu0 %420
    %v423 = vsel %vm225, %v162, 0
    %v426 = vsel %vm225, %v421, 0
    %428 = vmatprep.subr.bf16.mxu0 0
    %429 = vmatpush1.bf16.xpose.msra.mxu0 %v426
    %430 = vmatprep.subr.bf16.mxu0 0
    %431 = vmatpush1.bf16.xpose.msra.mxu0 0
    %432 = vmatprep.subr.bf16.mxu0 0
    %433 = vmatpush1.bf16.xpose.msra.mxu0 0
    %434 = vmatprep.subr.bf16.mxu0 0
    %435 = vmatpush1.bf16.xpose.msra.mxu0 0
    %436 = vmatprep.subr.bf16.mxu0 0
    %437 = vmatpush1.bf16.xpose.msra.mxu0 0
    %438 = vmatprep.subr.bf16.mxu0 0
    %439 = vmatpush1.bf16.xpose.msra.mxu0 0
    %440 = vmatprep.subr.bf16.mxu0 0
    %441 = vmatpush1.bf16.xpose.msra.mxu0 0
    %442 = vmatprep.subr.bf16.mxu0 0
    %443 = vmatpush1.bf16.xpose.msra.mxu0 0
    %444 = vmatprep.subr.bf16.mxu0 0
    %445 = vmatpush1.bf16.xpose.msra.mxu0 0
    %446 = vmatprep.subr.bf16.mxu0 0
    %447 = vmatpush1.bf16.xpose.msra.mxu0 0
    %448 = vmatprep.subr.bf16.mxu0 0
    %449 = vmatpush1.bf16.xpose.msra.mxu0 0
    %450 = vmatprep.subr.bf16.mxu0 0
    %451 = vmatpush1.bf16.xpose.msra.mxu0 0
    %452 = vmatprep.subr.bf16.mxu0 0
    %453 = vmatpush1.bf16.xpose.msra.mxu0 0
    %454 = vmatprep.subr.bf16.mxu0 0
    %455 = vmatpush1.bf16.xpose.msra.mxu0 0
    %456 = vmatprep.subr.bf16.mxu0 0
    %457 = vmatpush1.bf16.xpose.msra.mxu0 0
    %458 = vmatprep.subr.bf16.mxu0 0
    %459 = vmatpush1.bf16.xpose.msra.mxu0 0
    %460 = vmatprep.mubr.bf16.mxu0 0
    %461 = vmatmul.mubr.bf16.gmra.mrb[0].mxu0 %v423
    %v462 = vpop.f32.mrb[0].mxu0
    %v463 = vadd.f32 %v201, %v462
    %v464 = vpop.f32.mrb[0].mxu0
    %v465 = vpop.f32.mrb[0].mxu0
    %v466 = vpop.f32.mrb[0].mxu0
    %467 = vdwg.mxu0
    %469 = vrot.lane.b32.xlu0 %v163, 96
    %v470 = vpop.permute.xlu0 %469
    %v472 = vsel %vm225, %v163, 0
    %v475 = vsel %vm225, %v470, 0
    %477 = vmatprep.subr.bf16.mxu0 0
    %478 = vmatpush1.bf16.xpose.msra.mxu0 %v475
    %479 = vmatprep.subr.bf16.mxu0 0
    %480 = vmatpush1.bf16.xpose.msra.mxu0 0
    %481 = vmatprep.subr.bf16.mxu0 0
    %482 = vmatpush1.bf16.xpose.msra.mxu0 0
    %483 = vmatprep.subr.bf16.mxu0 0
    %484 = vmatpush1.bf16.xpose.msra.mxu0 0
    %485 = vmatprep.subr.bf16.mxu0 0
    %486 = vmatpush1.bf16.xpose.msra.mxu0 0
    %487 = vmatprep.subr.bf16.mxu0 0
    %488 = vmatpush1.bf16.xpose.msra.mxu0 0
    %489 = vmatprep.subr.bf16.mxu0 0
    %490 = vmatpush1.bf16.xpose.msra.mxu0 0
    %491 = vmatprep.subr.bf16.mxu0 0
    %492 = vmatpush1.bf16.xpose.msra.mxu0 0
    %493 = vmatprep.subr.bf16.mxu0 0
    %494 = vmatpush1.bf16.xpose.msra.mxu0 0
    %495 = vmatprep.subr.bf16.mxu0 0
    %496 = vmatpush1.bf16.xpose.msra.mxu0 0
    %497 = vmatprep.subr.bf16.mxu0 0
    %498 = vmatpush1.bf16.xpose.msra.mxu0 0
    %499 = vmatprep.subr.bf16.mxu0 0
    %500 = vmatpush1.bf16.xpose.msra.mxu0 0
    %501 = vmatprep.subr.bf16.mxu0 0
    %502 = vmatpush1.bf16.xpose.msra.mxu0 0
    %503 = vmatprep.subr.bf16.mxu0 0
    %504 = vmatpush1.bf16.xpose.msra.mxu0 0
    %505 = vmatprep.subr.bf16.mxu0 0
    %506 = vmatpush1.bf16.xpose.msra.mxu0 0
    %507 = vmatprep.subr.bf16.mxu0 0
    %508 = vmatpush1.bf16.xpose.msra.mxu0 0
    %509 = vmatprep.mubr.bf16.mxu0 0
    %510 = vmatmul.mubr.bf16.gmra.mrb[0].mxu0 %v472
    %v511 = vpop.f32.mrb[0].mxu0
    %v512 = vadd.f32 %v205, %v511
    %v513 = vpop.f32.mrb[0].mxu0
    %v514 = vpop.f32.mrb[0].mxu0
    %v515 = vpop.f32.mrb[0].mxu0
    %516 = vdwg.mxu0
    %518 = vrot.lane.b32.xlu0 %v164, 96
    %v519 = vpop.permute.xlu0 %518
    %v521 = vsel %vm225, %v164, 0
    %v524 = vsel %vm225, %v519, 0
    %526 = vmatprep.subr.bf16.mxu0 0
    %527 = vmatpush1.bf16.xpose.msra.mxu0 %v524
    %528 = vmatprep.subr.bf16.mxu0 0
    %529 = vmatpush1.bf16.xpose.msra.mxu0 0
    %530 = vmatprep.subr.bf16.mxu0 0
    %531 = vmatpush1.bf16.xpose.msra.mxu0 0
    %532 = vmatprep.subr.bf16.mxu0 0
    %533 = vmatpush1.bf16.xpose.msra.mxu0 0
    %534 = vmatprep.subr.bf16.mxu0 0
    %535 = vmatpush1.bf16.xpose.msra.mxu0 0
    %536 = vmatprep.subr.bf16.mxu0 0
    %537 = vmatpush1.bf16.xpose.msra.mxu0 0
    %538 = vmatprep.subr.bf16.mxu0 0
    %539 = vmatpush1.bf16.xpose.msra.mxu0 0
    %540 = vmatprep.subr.bf16.mxu0 0
    %541 = vmatpush1.bf16.xpose.msra.mxu0 0
    %542 = vmatprep.subr.bf16.mxu0 0
    %543 = vmatpush1.bf16.xpose.msra.mxu0 0
    %544 = vmatprep.subr.bf16.mxu0 0
    %545 = vmatpush1.bf16.xpose.msra.mxu0 0
    %546 = vmatprep.subr.bf16.mxu0 0
    %547 = vmatpush1.bf16.xpose.msra.mxu0 0
    %548 = vmatprep.subr.bf16.mxu0 0
    %549 = vmatpush1.bf16.xpose.msra.mxu0 0
    %550 = vmatprep.subr.bf16.mxu0 0
    %551 = vmatpush1.bf16.xpose.msra.mxu0 0
    %552 = vmatprep.subr.bf16.mxu0 0
    %553 = vmatpush1.bf16.xpose.msra.mxu0 0
    %554 = vmatprep.subr.bf16.mxu0 0
    %555 = vmatpush1.bf16.xpose.msra.mxu0 0
    %556 = vmatprep.subr.bf16.mxu0 0
    %557 = vmatpush1.bf16.xpose.msra.mxu0 0
    %558 = vmatprep.mubr.bf16.mxu0 0
    %559 = vmatmul.mubr.bf16.gmra.mrb[0].mxu0 %v521
    %v560 = vpop.f32.mrb[0].mxu0
    %v561 = vadd.f32 %v209, %v560
    %v562 = vpop.f32.mrb[0].mxu0
    %v563 = vpop.f32.mrb[0].mxu0
    %v564 = vpop.f32.mrb[0].mxu0
    %565 = vdwg.mxu0
    %567 = vrot.lane.b32.xlu0 %v165, 96
    %v568 = vpop.permute.xlu0 %567
    %v570 = vsel %vm225, %v165, 0
    %v573 = vsel %vm225, %v568, 0
    %575 = vmatprep.subr.bf16.mxu0 0
    %576 = vmatpush1.bf16.xpose.msra.mxu0 %v573
    %577 = vmatprep.subr.bf16.mxu0 0
    %578 = vmatpush1.bf16.xpose.msra.mxu0 0
    %579 = vmatprep.subr.bf16.mxu0 0
    %580 = vmatpush1.bf16.xpose.msra.mxu0 0
    %581 = vmatprep.subr.bf16.mxu0 0
    %582 = vmatpush1.bf16.xpose.msra.mxu0 0
    %583 = vmatprep.subr.bf16.mxu0 0
    %584 = vmatpush1.bf16.xpose.msra.mxu0 0
    %585 = vmatprep.subr.bf16.mxu0 0
    %586 = vmatpush1.bf16.xpose.msra.mxu0 0
    %587 = vmatprep.subr.bf16.mxu0 0
    %588 = vmatpush1.bf16.xpose.msra.mxu0 0
    %589 = vmatprep.subr.bf16.mxu0 0
    %590 = vmatpush1.bf16.xpose.msra.mxu0 0
    %591 = vmatprep.subr.bf16.mxu0 0
    %592 = vmatpush1.bf16.xpose.msra.mxu0 0
    %593 = vmatprep.subr.bf16.mxu0 0
    %594 = vmatpush1.bf16.xpose.msra.mxu0 0
    %595 = vmatprep.subr.bf16.mxu0 0
    %596 = vmatpush1.bf16.xpose.msra.mxu0 0
    %597 = vmatprep.subr.bf16.mxu0 0
    %598 = vmatpush1.bf16.xpose.msra.mxu0 0
    %599 = vmatprep.subr.bf16.mxu0 0
    %600 = vmatpush1.bf16.xpose.msra.mxu0 0
    %601 = vmatprep.subr.bf16.mxu0 0
    %602 = vmatpush1.bf16.xpose.msra.mxu0 0
    %603 = vmatprep.subr.bf16.mxu0 0
    %604 = vmatpush1.bf16.xpose.msra.mxu0 0
    %605 = vmatprep.subr.bf16.mxu0 0
    %606 = vmatpush1.bf16.xpose.msra.mxu0 0
    %607 = vmatprep.mubr.bf16.mxu0 0
    %608 = vmatmul.mubr.bf16.gmra.mrb[0].mxu0 %v570
    %v609 = vpop.f32.mrb[0].mxu0
    %v610 = vadd.f32 %v213, %v609
    %v611 = vpop.f32.mrb[0].mxu0
    %v612 = vpop.f32.mrb[0].mxu0
    %v613 = vpop.f32.mrb[0].mxu0
    %614 = vdwg.mxu0
    %v615 = vsel %vm225, %v267, -inf
    %616 = vmax.xlane.f32.xlu0 %v615
    %v617 = vpop.xlane.xlu0 %616
    %v618 = vsel %vm225, %v316, -inf
    %619 = vmax.xlane.f32.xlu0 %v618
    %v620 = vpop.xlane.xlu0 %619
    %v621 = vsel %vm225, %v365, -inf
    %622 = vmax.xlane.f32.xlu0 %v621
    %v623 = vpop.xlane.xlu0 %622
    %v624 = vsel %vm225, %v414, -inf
    %625 = vmax.xlane.f32.xlu0 %v624
    %v626 = vpop.xlane.xlu0 %625
    %v627 = vsel %vm225, %v463, -inf
    %628 = vmax.xlane.f32.xlu0 %v627
    %v629 = vpop.xlane.xlu0 %628
    %v630 = vsel %vm225, %v512, -inf
    %631 = vmax.xlane.f32.xlu0 %v630
    %v632 = vpop.xlane.xlu0 %631
    %v633 = vsel %vm225, %v561, -inf
    %634 = vmax.xlane.f32.xlu0 %v633
    %v635 = vpop.xlane.xlu0 %634
    %v636 = vsel %vm225, %v610, -inf
    %637 = vmax.xlane.f32.xlu0 %v636
    %v638 = vpop.xlane.xlu0 %637
    %v639 = vsub.f32 %v267, %v617
    %v640 = vsub.f32 %v316, %v620
    %v641 = vsub.f32 %v365, %v623
    %v642 = vsub.f32 %v414, %v626
    %v643 = vsub.f32 %v463, %v629
    %v644 = vsub.f32 %v512, %v632
    %v645 = vsub.f32 %v561, %v635
    %v646 = vsub.f32 %v610, %v638
    %v647 = vmul.f32 %v639, 1.442695
    %v648 = vpow.pop %v647
    %v649 = vmul.f32 %v640, 1.442695
    %v650 = vpow.pop %v649
    %v651 = vmul.f32 %v641, 1.442695
    %v652 = vpow.pop %v651
    %v653 = vmul.f32 %v642, 1.442695
    %v654 = vpow.pop %v653
    %v655 = vmul.f32 %v643, 1.442695
    %v656 = vpow.pop %v655
    %v657 = vmul.f32 %v644, 1.442695
    %v658 = vpow.pop %v657
    %v659 = vmul.f32 %v645, 1.442695
    %v660 = vpow.pop %v659
    %v661 = vmul.f32 %v646, 1.442695
    %v662 = vpow.pop %v661
    %v663 = vsel %vm225, %v648, 0.0
    %664 = vadd.xlane.f32.xlu0 %v663
    %v665 = vpop.xlane.xlu0 %664
    %v666 = vsel %vm225, %v650, 0.0
    %667 = vadd.xlane.f32.xlu0 %v666
    %v668 = vpop.xlane.xlu0 %667
    %v669 = vsel %vm225, %v652, 0.0
    %670 = vadd.xlane.f32.xlu0 %v669
    %v671 = vpop.xlane.xlu0 %670
    %v672 = vsel %vm225, %v654, 0.0
    %673 = vadd.xlane.f32.xlu0 %v672
    %v674 = vpop.xlane.xlu0 %673
    %v675 = vsel %vm225, %v656, 0.0
    %676 = vadd.xlane.f32.xlu0 %v675
    %v677 = vpop.xlane.xlu0 %676
    %v678 = vsel %vm225, %v658, 0.0
    %679 = vadd.xlane.f32.xlu0 %v678
    %v680 = vpop.xlane.xlu0 %679
    %v681 = vsel %vm225, %v660, 0.0
    %682 = vadd.xlane.f32.xlu0 %v681
    %v683 = vpop.xlane.xlu0 %682
    %v684 = vsel %vm225, %v662, 0.0
    %685 = vadd.xlane.f32.xlu0 %v684
    %v686 = vpop.xlane.xlu0 %685
    %v687 = vrcp.pop %v665
    %v688 = vmul.f32 %v648, %v687
    %v689 = vrcp.pop %v668
    %v690 = vmul.f32 %v650, %v689
    %v691 = vrcp.pop %v671
    %v692 = vmul.f32 %v652, %v691
    %v693 = vrcp.pop %v674
    %v694 = vmul.f32 %v654, %v693
    %v695 = vrcp.pop %v677
    %v696 = vmul.f32 %v656, %v695
    %v697 = vrcp.pop %v680
    %v698 = vmul.f32 %v658, %v697
    %v699 = vrcp.pop %v683
    %v700 = vmul.f32 %v660, %v699
    %v701 = vrcp.pop %v686
    %v702 = vmul.f32 %v662, %v701
    %v703 = vpack.c.bf16 %v688, %v688
    %v704 = vpack.c.bf16 %v690, %v690
    %v705 = vpack.c.bf16 %v692, %v692
    %v706 = vpack.c.bf16 %v694, %v694
    %v707 = vpack.c.bf16 %v696, %v696
    %v708 = vpack.c.bf16 %v698, %v698
    %v709 = vpack.c.bf16 %v700, %v700
    %v710 = vpack.c.bf16 %v702, %v702
    %711 = vrot.lane.b32.xlu0 %v158, 64
    %v712 = vpop.permute.xlu0 %711
    %v714 = vsel %vm225, %v703, 0
    %vm716 = vcmask 1043456
    %v718 = vsel %vm716, %v712, 0
    %720 = vmatprep.subr.bf16.mxu0 0
    %721 = vmatpush1.bf16.msra.mxu0 %v718
    %722 = vmatprep.subr.bf16.mxu0 0
    %723 = vmatpush1.bf16.msra.mxu0 0
    %724 = vmatprep.subr.bf16.mxu0 0
    %725 = vmatpush1.bf16.msra.mxu0 0
    %726 = vmatprep.subr.bf16.mxu0 0
    %727 = vmatpush1.bf16.msra.mxu0 0
    %728 = vmatprep.subr.bf16.mxu0 0
    %729 = vmatpush1.bf16.msra.mxu0 0
    %730 = vmatprep.subr.bf16.mxu0 0
    %731 = vmatpush1.bf16.msra.mxu0 0
    %732 = vmatprep.subr.bf16.mxu0 0
    %733 = vmatpush1.bf16.msra.mxu0 0
    %734 = vmatprep.subr.bf16.mxu0 0
    %735 = vmatpush1.bf16.msra.mxu0 0
    %736 = vmatprep.subr.bf16.mxu0 0
    %737 = vmatpush1.bf16.msra.mxu0 0
    %738 = vmatprep.subr.bf16.mxu0 0
    %739 = vmatpush1.bf16.msra.mxu0 0
    %740 = vmatprep.subr.bf16.mxu0 0
    %741 = vmatpush1.bf16.msra.mxu0 0
    %742 = vmatprep.subr.bf16.mxu0 0
    %743 = vmatpush1.bf16.msra.mxu0 0
    %744 = vmatprep.subr.bf16.mxu0 0
    %745 = vmatpush1.bf16.msra.mxu0 0
    %746 = vmatprep.subr.bf16.mxu0 0
    %747 = vmatpush1.bf16.msra.mxu0 0
    %748 = vmatprep.subr.bf16.mxu0 0
    %749 = vmatpush1.bf16.msra.mxu0 0
    %750 = vmatprep.subr.bf16.mxu0 0
    %751 = vmatpush1.bf16.msra.mxu0 0
    %752 = vmatprep.mubr.bf16.mxu0 0
    %753 = vmatmul.mubr.bf16.gmra.mrb[0].mxu0 %v714
    %v754 = vpop.f32.mrb[0].mxu0
    %v755 = vadd.f32 0.0, %v754
    %v756 = vpop.f32.mrb[0].mxu0
    %v757 = vpop.f32.mrb[0].mxu0
    %v758 = vpop.f32.mrb[0].mxu0
    %759 = vdwg.mxu0
    %760 = vrot.lane.b32.xlu0 %v159, 64
    %v761 = vpop.permute.xlu0 %760
    %v763 = vsel %vm225, %v704, 0
    %v766 = vsel %vm716, %v761, 0
    %768 = vmatprep.subr.bf16.mxu0 0
    %769 = vmatpush1.bf16.msra.mxu0 %v766
    %770 = vmatprep.subr.bf16.mxu0 0
    %771 = vmatpush1.bf16.msra.mxu0 0
    %772 = vmatprep.subr.bf16.mxu0 0
    %773 = vmatpush1.bf16.msra.mxu0 0
    %774 = vmatprep.subr.bf16.mxu0 0
    %775 = vmatpush1.bf16.msra.mxu0 0
    %776 = vmatprep.subr.bf16.mxu0 0
    %777 = vmatpush1.bf16.msra.mxu0 0
    %778 = vmatprep.subr.bf16.mxu0 0
    %779 = vmatpush1.bf16.msra.mxu0 0
    %780 = vmatprep.subr.bf16.mxu0 0
    %781 = vmatpush1.bf16.msra.mxu0 0
    %782 = vmatprep.subr.bf16.mxu0 0
    %783 = vmatpush1.bf16.msra.mxu0 0
    %784 = vmatprep.subr.bf16.mxu0 0
    %785 = vmatpush1.bf16.msra.mxu0 0
    %786 = vmatprep.subr.bf16.mxu0 0
    %787 = vmatpush1.bf16.msra.mxu0 0
    %788 = vmatprep.subr.bf16.mxu0 0
    %789 = vmatpush1.bf16.msra.mxu0 0
    %790 = vmatprep.subr.bf16.mxu0 0
    %791 = vmatpush1.bf16.msra.mxu0 0
    %792 = vmatprep.subr.bf16.mxu0 0
    %793 = vmatpush1.bf16.msra.mxu0 0
    %794 = vmatprep.subr.bf16.mxu0 0
    %795 = vmatpush1.bf16.msra.mxu0 0
    %796 = vmatprep.subr.bf16.mxu0 0
    %797 = vmatpush1.bf16.msra.mxu0 0
    %798 = vmatprep.subr.bf16.mxu0 0
    %799 = vmatpush1.bf16.msra.mxu0 0
    %800 = vmatprep.mubr.bf16.mxu0 0
    %801 = vmatmul.mubr.bf16.gmra.mrb[0].mxu0 %v763
    %v802 = vpop.f32.mrb[0].mxu0
    %v803 = vadd.f32 0.0, %v802
    %v804 = vpop.f32.mrb[0].mxu0
    %v805 = vpop.f32.mrb[0].mxu0
    %v806 = vpop.f32.mrb[0].mxu0
    %807 = vdwg.mxu0
    %808 = vrot.lane.b32.xlu0 %v160, 64
    %v809 = vpop.permute.xlu0 %808
    %v811 = vsel %vm225, %v705, 0
    %v814 = vsel %vm716, %v809, 0
    %816 = vmatprep.subr.bf16.mxu0 0
    %817 = vmatpush1.bf16.msra.mxu0 %v814
    %818 = vmatprep.subr.bf16.mxu0 0
    %819 = vmatpush1.bf16.msra.mxu0 0
    %820 = vmatprep.subr.bf16.mxu0 0
    %821 = vmatpush1.bf16.msra.mxu0 0
    %822 = vmatprep.subr.bf16.mxu0 0
    %823 = vmatpush1.bf16.msra.mxu0 0
    %824 = vmatprep.subr.bf16.mxu0 0
    %825 = vmatpush1.bf16.msra.mxu0 0
    %826 = vmatprep.subr.bf16.mxu0 0
    %827 = vmatpush1.bf16.msra.mxu0 0
    %828 = vmatprep.subr.bf16.mxu0 0
    %829 = vmatpush1.bf16.msra.mxu0 0
    %830 = vmatprep.subr.bf16.mxu0 0
    %831 = vmatpush1.bf16.msra.mxu0 0
    %832 = vmatprep.subr.bf16.mxu0 0
    %833 = vmatpush1.bf16.msra.mxu0 0
    %834 = vmatprep.subr.bf16.mxu0 0
    %835 = vmatpush1.bf16.msra.mxu0 0
    %836 = vmatprep.subr.bf16.mxu0 0
    %837 = vmatpush1.bf16.msra.mxu0 0
    %838 = vmatprep.subr.bf16.mxu0 0
    %839 = vmatpush1.bf16.msra.mxu0 0
    %840 = vmatprep.subr.bf16.mxu0 0
    %841 = vmatpush1.bf16.msra.mxu0 0
    %842 = vmatprep.subr.bf16.mxu0 0
    %843 = vmatpush1.bf16.msra.mxu0 0
    %844 = vmatprep.subr.bf16.mxu0 0
    %845 = vmatpush1.bf16.msra.mxu0 0
    %846 = vmatprep.subr.bf16.mxu0 0
    %847 = vmatpush1.bf16.msra.mxu0 0
    %848 = vmatprep.mubr.bf16.mxu0 0
    %849 = vmatmul.mubr.bf16.gmra.mrb[0].mxu0 %v811
    %v850 = vpop.f32.mrb[0].mxu0
    %v851 = vadd.f32 0.0, %v850
    %v852 = vpop.f32.mrb[0].mxu0
    %v853 = vpop.f32.mrb[0].mxu0
    %v854 = vpop.f32.mrb[0].mxu0
    %855 = vdwg.mxu0
    %856 = vrot.lane.b32.xlu0 %v161, 64
    %v857 = vpop.permute.xlu0 %856
    %v859 = vsel %vm225, %v706, 0
    %v862 = vsel %vm716, %v857, 0
    %864 = vmatprep.subr.bf16.mxu0 0
    %865 = vmatpush1.bf16.msra.mxu0 %v862
    %866 = vmatprep.subr.bf16.mxu0 0
    %867 = vmatpush1.bf16.msra.mxu0 0
    %868 = vmatprep.subr.bf16.mxu0 0
    %869 = vmatpush1.bf16.msra.mxu0 0
    %870 = vmatprep.subr.bf16.mxu0 0
    %871 = vmatpush1.bf16.msra.mxu0 0
    %872 = vmatprep.subr.bf16.mxu0 0
    %873 = vmatpush1.bf16.msra.mxu0 0
    %874 = vmatprep.subr.bf16.mxu0 0
    %875 = vmatpush1.bf16.msra.mxu0 0
    %876 = vmatprep.subr.bf16.mxu0 0
    %877 = vmatpush1.bf16.msra.mxu0 0
    %878 = vmatprep.subr.bf16.mxu0 0
    %879 = vmatpush1.bf16.msra.mxu0 0
    %880 = vmatprep.subr.bf16.mxu0 0
    %881 = vmatpush1.bf16.msra.mxu0 0
    %882 = vmatprep.subr.bf16.mxu0 0
    %883 = vmatpush1.bf16.msra.mxu0 0
    %884 = vmatprep.subr.bf16.mxu0 0
    %885 = vmatpush1.bf16.msra.mxu0 0
    %886 = vmatprep.subr.bf16.mxu0 0
    %887 = vmatpush1.bf16.msra.mxu0 0
    %888 = vmatprep.subr.bf16.mxu0 0
    %889 = vmatpush1.bf16.msra.mxu0 0
    %890 = vmatprep.subr.bf16.mxu0 0
    %891 = vmatpush1.bf16.msra.mxu0 0
    %892 = vmatprep.subr.bf16.mxu0 0
    %893 = vmatpush1.bf16.msra.mxu0 0
    %894 = vmatprep.subr.bf16.mxu0 0
    %895 = vmatpush1.bf16.msra.mxu0 0
    %896 = vmatprep.mubr.bf16.mxu0 0
    %897 = vmatmul.mubr.bf16.gmra.mrb[0].mxu0 %v859
    %v898 = vpop.f32.mrb[0].mxu0
    %v899 = vadd.f32 0.0, %v898
    %v900 = vpop.f32.mrb[0].mxu0
    %v901 = vpop.f32.mrb[0].mxu0
    %v902 = vpop.f32.mrb[0].mxu0
    %903 = vdwg.mxu0
    %904 = vrot.lane.b32.xlu0 %v162, 64
    %v905 = vpop.permute.xlu0 %904
    %v907 = vsel %vm225, %v707, 0
    %v910 = vsel %vm716, %v905, 0
    %912 = vmatprep.subr.bf16.mxu0 0
    %913 = vmatpush1.bf16.msra.mxu0 %v910
    %914 = vmatprep.subr.bf16.mxu0 0
    %915 = vmatpush1.bf16.msra.mxu0 0
    %916 = vmatprep.subr.bf16.mxu0 0
    %917 = vmatpush1.bf16.msra.mxu0 0
    %918 = vmatprep.subr.bf16.mxu0 0
    %919 = vmatpush1.bf16.msra.mxu0 0
    %920 = vmatprep.subr.bf16.mxu0 0
    %921 = vmatpush1.bf16.msra.mxu0 0
    %922 = vmatprep.subr.bf16.mxu0 0
    %923 = vmatpush1.bf16.msra.mxu0 0
    %924 = vmatprep.subr.bf16.mxu0 0
    %925 = vmatpush1.bf16.msra.mxu0 0
    %926 = vmatprep.subr.bf16.mxu0 0
    %927 = vmatpush1.bf16.msra.mxu0 0
    %928 = vmatprep.subr.bf16.mxu0 0
    %929 = vmatpush1.bf16.msra.mxu0 0
    %930 = vmatprep.subr.bf16.mxu0 0
    %931 = vmatpush1.bf16.msra.mxu0 0
    %932 = vmatprep.subr.bf16.mxu0 0
    %933 = vmatpush1.bf16.msra.mxu0 0
    %934 = vmatprep.subr.bf16.mxu0 0
    %935 = vmatpush1.bf16.msra.mxu0 0
    %936 = vmatprep.subr.bf16.mxu0 0
    %937 = vmatpush1.bf16.msra.mxu0 0
    %938 = vmatprep.subr.bf16.mxu0 0
    %939 = vmatpush1.bf16.msra.mxu0 0
    %940 = vmatprep.subr.bf16.mxu0 0
    %941 = vmatpush1.bf16.msra.mxu0 0
    %942 = vmatprep.subr.bf16.mxu0 0
    %943 = vmatpush1.bf16.msra.mxu0 0
    %944 = vmatprep.mubr.bf16.mxu0 0
    %945 = vmatmul.mubr.bf16.gmra.mrb[0].mxu0 %v907
    %v946 = vpop.f32.mrb[0].mxu0
    %v947 = vadd.f32 0.0, %v946
    %v948 = vpop.f32.mrb[0].mxu0
    %v949 = vpop.f32.mrb[0].mxu0
    %v950 = vpop.f32.mrb[0].mxu0
    %951 = vdwg.mxu0
    %952 = vrot.lane.b32.xlu0 %v163, 64
    %v953 = vpop.permute.xlu0 %952
    %v955 = vsel %vm225, %v708, 0
    %v958 = vsel %vm716, %v953, 0
    %960 = vmatprep.subr.bf16.mxu0 0
    %961 = vmatpush1.bf16.msra.mxu0 %v958
    %962 = vmatprep.subr.bf16.mxu0 0
    %963 = vmatpush1.bf16.msra.mxu0 0
    %964 = vmatprep.subr.bf16.mxu0 0
    %965 = vmatpush1.bf16.msra.mxu0 0
    %966 = vmatprep.subr.bf16.mxu0 0
    %967 = vmatpush1.bf16.msra.mxu0 0
    %968 = vmatprep.subr.bf16.mxu0 0
    %969 = vmatpush1.bf16.msra.mxu0 0
    %970 = vmatprep.subr.bf16.mxu0 0
    %971 = vmatpush1.bf16.msra.mxu0 0
    %972 = vmatprep.subr.bf16.mxu0 0
    %973 = vmatpush1.bf16.msra.mxu0 0
    %974 = vmatprep.subr.bf16.mxu0 0
    %975 = vmatpush1.bf16.msra.mxu0 0
    %976 = vmatprep.subr.bf16.mxu0 0
    %977 = vmatpush1.bf16.msra.mxu0 0
    %978 = vmatprep.subr.bf16.mxu0 0
    %979 = vmatpush1.bf16.msra.mxu0 0
    %980 = vmatprep.subr.bf16.mxu0 0
    %981 = vmatpush1.bf16.msra.mxu0 0
    %982 = vmatprep.subr.bf16.mxu0 0
    %983 = vmatpush1.bf16.msra.mxu0 0
    %984 = vmatprep.subr.bf16.mxu0 0
    %985 = vmatpush1.bf16.msra.mxu0 0
    %986 = vmatprep.subr.bf16.mxu0 0
    %987 = vmatpush1.bf16.msra.mxu0 0
    %988 = vmatprep.subr.bf16.mxu0 0
    %989 = vmatpush1.bf16.msra.mxu0 0
    %990 = vmatprep.subr.bf16.mxu0 0
    %991 = vmatpush1.bf16.msra.mxu0 0
    %992 = vmatprep.mubr.bf16.mxu0 0
    %993 = vmatmul.mubr.bf16.gmra.mrb[0].mxu0 %v955
    %v994 = vpop.f32.mrb[0].mxu0
    %v995 = vadd.f32 0.0, %v994
    %v996 = vpop.f32.mrb[0].mxu0
    %v997 = vpop.f32.mrb[0].mxu0
    %v998 = vpop.f32.mrb[0].mxu0
    %999 = vdwg.mxu0
    %1000 = vrot.lane.b32.xlu0 %v164, 64
    %v1001 = vpop.permute.xlu0 %1000
    %v1003 = vsel %vm225, %v709, 0
    %v1006 = vsel %vm716, %v1001, 0
    %1008 = vmatprep.subr.bf16.mxu0 0
    %1009 = vmatpush1.bf16.msra.mxu0 %v1006
    %1010 = vmatprep.subr.bf16.mxu0 0
    %1011 = vmatpush1.bf16.msra.mxu0 0
    %1012 = vmatprep.subr.bf16.mxu0 0
    %1013 = vmatpush1.bf16.msra.mxu0 0
    %1014 = vmatprep.subr.bf16.mxu0 0
    %1015 = vmatpush1.bf16.msra.mxu0 0
    %1016 = vmatprep.subr.bf16.mxu0 0
    %1017 = vmatpush1.bf16.msra.mxu0 0
    %1018 = vmatprep.subr.bf16.mxu0 0
    %1019 = vmatpush1.bf16.msra.mxu0 0
    %1020 = vmatprep.subr.bf16.mxu0 0
    %1021 = vmatpush1.bf16.msra.mxu0 0
    %1022 = vmatprep.subr.bf16.mxu0 0
    %1023 = vmatpush1.bf16.msra.mxu0 0
    %1024 = vmatprep.subr.bf16.mxu0 0
    %1025 = vmatpush1.bf16.msra.mxu0 0
    %1026 = vmatprep.subr.bf16.mxu0 0
    %1027 = vmatpush1.bf16.msra.mxu0 0
    %1028 = vmatprep.subr.bf16.mxu0 0
    %1029 = vmatpush1.bf16.msra.mxu0 0
    %1030 = vmatprep.subr.bf16.mxu0 0
    %1031 = vmatpush1.bf16.msra.mxu0 0
    %1032 = vmatprep.subr.bf16.mxu0 0
    %1033 = vmatpush1.bf16.msra.mxu0 0
    %1034 = vmatprep.subr.bf16.mxu0 0
    %1035 = vmatpush1.bf16.msra.mxu0 0
    %1036 = vmatprep.subr.bf16.mxu0 0
    %1037 = vmatpush1.bf16.msra.mxu0 0
    %1038 = vmatprep.subr.bf16.mxu0 0
    %1039 = vmatpush1.bf16.msra.mxu0 0
    %1040 = vmatprep.mubr.bf16.mxu0 0
    %1041 = vmatmul.mubr.bf16.gmra.mrb[0].mxu0 %v1003
    %v1042 = vpop.f32.mrb[0].mxu0
    %v1043 = vadd.f32 0.0, %v1042
    %v1044 = vpop.f32.mrb[0].mxu0
    %v1045 = vpop.f32.mrb[0].mxu0
    %v1046 = vpop.f32.mrb[0].mxu0
    %1047 = vdwg.mxu0
    %1048 = vrot.lane.b32.xlu0 %v165, 64
    %v1049 = vpop.permute.xlu0 %1048
    %v1051 = vsel %vm225, %v710, 0
    %v1054 = vsel %vm716, %v1049, 0
    %1056 = vmatprep.subr.bf16.mxu0 0
    %1057 = vmatpush1.bf16.msra.mxu0 %v1054
    %1058 = vmatprep.subr.bf16.mxu0 0
    %1059 = vmatpush1.bf16.msra.mxu0 0
    %1060 = vmatprep.subr.bf16.mxu0 0
    %1061 = vmatpush1.bf16.msra.mxu0 0
    %1062 = vmatprep.subr.bf16.mxu0 0
    %1063 = vmatpush1.bf16.msra.mxu0 0
    %1064 = vmatprep.subr.bf16.mxu0 0
    %1065 = vmatpush1.bf16.msra.mxu0 0
    %1066 = vmatprep.subr.bf16.mxu0 0
    %1067 = vmatpush1.bf16.msra.mxu0 0
    %1068 = vmatprep.subr.bf16.mxu0 0
    %1069 = vmatpush1.bf16.msra.mxu0 0
    %1070 = vmatprep.subr.bf16.mxu0 0
    %1071 = vmatpush1.bf16.msra.mxu0 0
    %1072 = vmatprep.subr.bf16.mxu0 0
    %1073 = vmatpush1.bf16.msra.mxu0 0
    %1074 = vmatprep.subr.bf16.mxu0 0
    %1075 = vmatpush1.bf16.msra.mxu0 0
    %1076 = vmatprep.subr.bf16.mxu0 0
    %1077 = vmatpush1.bf16.msra.mxu0 0
    %1078 = vmatprep.subr.bf16.mxu0 0
    %1079 = vmatpush1.bf16.msra.mxu0 0
    %1080 = vmatprep.subr.bf16.mxu0 0
    %1081 = vmatpush1.bf16.msra.mxu0 0
    %1082 = vmatprep.subr.bf16.mxu0 0
    %1083 = vmatpush1.bf16.msra.mxu0 0
    %1084 = vmatprep.subr.bf16.mxu0 0
    %1085 = vmatpush1.bf16.msra.mxu0 0
    %1086 = vmatprep.subr.bf16.mxu0 0
    %1087 = vmatpush1.bf16.msra.mxu0 0
    %1088 = vmatprep.mubr.bf16.mxu0 0
    %1089 = vmatmul.mubr.bf16.gmra.mrb[0].mxu0 %v1051
    %v1090 = vpop.f32.mrb[0].mxu0
    %v1091 = vadd.f32 0.0, %v1090
    %v1092 = vpop.f32.mrb[0].mxu0
    %v1093 = vpop.f32.mrb[0].mxu0
    %v1094 = vpop.f32.mrb[0].mxu0
    %1095 = vdwg.mxu0
    %1098 = vrot.lane.b32.xlu0 %v803, 8
    %v1099 = vpop.permute.xlu0 %1098
    %1100 = vrot.lane.b32.xlu0 %v995, 8
    %v1101 = vpop.permute.xlu0 %1100
    %1106 = vrot.lane.b32.xlu0 %v851, 16
    %v1107 = vpop.permute.xlu0 %1106
    %1108 = vrot.lane.b32.xlu0 %v1043, 16
    %v1109 = vpop.permute.xlu0 %1108
    %1114 = vrot.lane.b32.xlu0 %v899, 24
    %v1115 = vpop.permute.xlu0 %1114
    %1116 = vrot.lane.b32.xlu0 %v1091, 24
    %v1117 = vpop.permute.xlu0 %1116
    %v1120 = vsel %vm225, %v755, %v1099
    %v1121 = vsel %vm225, %v947, %v1101
    %vm1122 = vcmask 130048
    %v1123 = vsel %vm1122, %v1120, %v1107
    %v1124 = vsel %vm1122, %v1121, %v1109
    %vm1125 = vcmask 195584
    %v1126 = vsel %vm1125, %v1123, %v1115
    %v1127 = vsel %vm1125, %v1124, %v1117
    %v1128 = vpack.c.bf16 %v1127, %v1126
    %v1129 = vld [vmem:[#allocation2] sm:$0xf]
    %v1130 = vld [vmem:[#allocation2 + $0x4] sm:$0xf]
    %v1131 = vld [vmem:[#allocation2 + $0x8] sm:$0xf]
    %v1132 = vld [vmem:[#allocation2 + $0xc] sm:$0xf]
    %v1133 = vld [vmem:[#allocation4] sm:$0x1]
    %v1135 = vlaneseq
    %v1136 = vshrl.u32 %v1135, 7
    %v1137 = vsub.s32 0, %v1136
    %v1138 = vrot.slane %v1133, %v1137
    %v1144 = vunpack.c.l.b16 %v1129
    %v1145 = vunpack.c.l.b16 %v1130
    %v1146 = vunpack.c.l.b16 %v1131
    %v1147 = vunpack.c.l.b16 %v1132
    %v1148 = vpack.c.b16 %v1145, %v1144
    %v1149 = vpack.c.b16 %v1147, %v1146
    %v1153 = vsel %vm93, %v1128, 0
    %1155 = vmatprep.subr.bf16.mxu0 0
    %1156 = vmatpush1.bf16.msra.mxu0 %v1148
    %1157 = vmatprep.subr.bf16.mxu0 0
    %1158 = vmatpush1.bf16.msra.mxu0 %v1149
    %1159 = vmatprep.subr.bf16.mxu0 0
    %1160 = vmatpush1.bf16.msra.mxu0 0
    %1161 = vmatprep.subr.bf16.mxu0 0
    %1162 = vmatpush1.bf16.msra.mxu0 0
    %1163 = vmatprep.subr.bf16.mxu0 0
    %1164 = vmatpush1.bf16.msra.mxu0 0
    %1165 = vmatprep.subr.bf16.mxu0 0
    %1166 = vmatpush1.bf16.msra.mxu0 0
    %1167 = vmatprep.subr.bf16.mxu0 0
    %1168 = vmatpush1.bf16.msra.mxu0 0
    %1169 = vmatprep.subr.bf16.mxu0 0
    %1170 = vmatpush1.bf16.msra.mxu0 0
    %1171 = vmatprep.subr.bf16.mxu0 0
    %1172 = vmatpush1.bf16.msra.mxu0 0
    %1173 = vmatprep.subr.bf16.mxu0 0
    %1174 = vmatpush1.bf16.msra.mxu0 0
    %1175 = vmatprep.subr.bf16.mxu0 0
    %1176 = vmatpush1.bf16.msra.mxu0 0
    %1177 = vmatprep.subr.bf16.mxu0 0
    %1178 = vmatpush1.bf16.msra.mxu0 0
    %1179 = vmatprep.subr.bf16.mxu0 0
    %1180 = vmatpush1.bf16.msra.mxu0 0
    %1181 = vmatprep.subr.bf16.mxu0 0
    %1182 = vmatpush1.bf16.msra.mxu0 0
    %1183 = vmatprep.subr.bf16.mxu0 0
    %1184 = vmatpush1.bf16.msra.mxu0 0
    %1185 = vmatprep.subr.bf16.mxu0 0
    %1186 = vmatpush1.bf16.msra.mxu0 0
    %1187 = vmatprep.mubr.bf16.mxu0 0
    %1188 = vmatmul.mubr.bf16.gmra.mrb[0].mxu0 %v1153
    %v1189 = vpop.f32.mrb[0].mxu0
    %v1190 = vadd.f32 %v1138, %v1189
    %v1191 = vpop.f32.mrb[0].mxu0
    %v1192 = vpop.f32.mrb[0].mxu0
    %v1193 = vadd.f32 %v1138, %v1192
    %v1194 = vpop.f32.mrb[0].mxu0
    %1195 = vdwg.mxu0
    %v1196 = vadd.f32 %v1190, %v67
    %v1197 = vadd.f32 %v1193, %v68
    %v1198 = vsel %vm93, %v1196, 0.0
    %1199 = vadd.xlane.f32.xlu0 %v1198
    %v1200 = vpop.xlane.xlu0 %1199
    %v1201 = vsel %vm93, %v1197, 0.0
    %1202 = vadd.xlane.f32.xlu0 %v1201
    %v1203 = vpop.xlane.xlu0 %1202
    %v1204 = vrcp.pop 32.0
    %v1205 = vmul.f32 %v1200, %v1204
    %v1206 = vmul.f32 %v1203, %v1204
    %v1207 = vsub.f32 %v1196, %v1205
    %v1208 = vsub.f32 %v1197, %v1206
    %v1209 = vmul.f32 %v1207, %v1207
    %v1210 = vmul.f32 %v1208, %v1208
    %v1211 = vsel %vm93, %v1209, 0.0
    %1212 = vadd.xlane.f32.xlu0 %v1211
    %v1213 = vpop.xlane.xlu0 %1212
    %v1214 = vsel %vm93, %v1210, 0.0
    %1215 = vadd.xlane.f32.xlu0 %v1214
    %v1216 = vpop.xlane.xlu0 %1215
    %v1217 = vmul.f32 %v1213, %v1204
    %v1218 = vmul.f32 %v1216, %v1204
    %v1219 = vadd.f32 %v1217, 1e-12
    %v1220 = vadd.f32 %v1218, 1e-12
    %v1221 = vrsqrt.pop %v1219
    %v1222 = vrsqrt.pop %v1220
    %v1223 = vmul.f32 %v1207, %v1221
    %v1224 = vmul.f32 %v1208, %v1222
    %v1225 = vld [vmem:[%s6] sm:$0x1]
    %v1227 = vlaneseq
    %v1228 = vshrl.u32 %v1227, 7
    %v1229 = vsub.s32 0, %v1228
    %v1230 = vrot.slane %v1225, %v1229
    %v1232 = vmul.f32 %v1223, %v1230
    %v1233 = vmul.f32 %v1224, %v1230
    %v1234 = vld [vmem:[#allocation6] sm:$0x1]
    %v1236 = vlaneseq
    %v1237 = vshrl.u32 %v1236, 7
    %v1238 = vsub.s32 0, %v1237
    %v1239 = vrot.slane %v1234, %v1238
    %v1241 = vadd.f32 %v1232, %v1239
    %v1242 = vadd.f32 %v1233, %v1239
    %v1244 = vrot.slane %v1241, 4
    %1245 = vrot.lane.b32.xlu0 %v1244, 32
    %v1246 = vpop.permute.xlu0 %1245
    %1249 = vrot.lane.b32.xlu0 %v1242, 64
    %v1250 = vpop.permute.xlu0 %1249
    %v1252 = vrot.slane %v1242, 4
    %1253 = vrot.lane.b32.xlu0 %v1252, 96
    %v1254 = vpop.permute.xlu0 %1253
    %v1256 = vsel %vm93, %v1241, %v1246
    %vm1257 = vcmask 523264
    %v1258 = vsel %vm1257, %v1256, %v1250
    %vm1259 = vcmask 785408
    %v1260 = vsel %vm1259, %v1258, %v1254
    %1261 = vst [vmem:[%s8] sm:$0xf] %v1260
    // Predicated region
    $region46: #{bert_selfatt_layer.1} parent=1 // pred_check
      _
    $region47: #{bert_selfatt_layer.1} parent=1 // pred_check_branch
      %1263 = sbr.rel (0) target = $region49
    $region48: #{bert_selfatt_layer.1} parent=1 // pred_region
      _
    $region49: #{bert_selfatt_layer.1} parent=1 // pred_fallthru
      _
    // Predicated region
    $region50: #{bert_selfatt_layer.1} parent=1 // pred_check
      _
    $region51: #{bert_selfatt_layer.1} parent=1 // pred_check_branch
      %1265 = sbr.rel (0) target = $region53
    $region52: #{bert_selfatt_layer.1} parent=1 // pred_region
      _
    $region53: #{bert_selfatt_layer.1} parent=1 // pred_fallthru
      _
    %1266 = vsyncpa [#allocation3], 1
    %1267 = vsyncpa [#allocation5], 1

</llo_original>
